<compile_context>
chip_gen: v7x
topology: tpu7x:2x2x1
jax: 0.10.0
libtpu: 0.0.40
codegen_flags: <defaults>
</compile_context>

<pallas_src>
import jax
import jax.numpy as jnp
from jax import lax
from jax.experimental import pallas as pl
from jax.experimental.pallas import tpu as pltpu

_EPS = 1e-5
_NUM_OUT = 10
_VMEM = pl.BlockSpec(memory_space=pltpu.MemorySpace.VMEM)


# ---------------------------------------------------------------- Pallas kernels
def _block_kernel(p_ref, w_ref, b_ref, g_ref, be_ref, o_ref):
    """Fused conv(3x3, as matmul) + 2x2/2 maxpool + BatchNorm(train) + ReLU.

    p_ref : (4, K, M) bf16  pool-window-grouped im2col patches, M = B*Hp*Wp (lanes)
    w_ref : (Cout, K) bf16  conv weight, K ordered (cin, dy, dx)
    b/g/be: (Cout, 1) f32   conv bias, BN gamma, BN beta
    o_ref : (Cout, M) bf16  activated block output (channel-major, lane-dense M)
    """
    w = w_ref[...]
    c0 = jnp.dot(w, p_ref[0], preferred_element_type=jnp.float32)
    c1 = jnp.dot(w, p_ref[1], preferred_element_type=jnp.float32)
    c2 = jnp.dot(w, p_ref[2], preferred_element_type=jnp.float32)
    c3 = jnp.dot(w, p_ref[3], preferred_element_type=jnp.float32)
    # maxpool over the 4 window positions; conv bias is constant per channel so
    # max(conv) + b == max(conv + b).
    p = jnp.maximum(jnp.maximum(c0, c1), jnp.maximum(c2, c3)) + b_ref[...]
    # BatchNorm training mode: per-channel mean / biased var over (N, Hp, Wp) == lanes.
    mean = jnp.mean(p, axis=1, keepdims=True)
    var = jnp.mean((p - mean) ** 2, axis=1, keepdims=True)
    xhat = (p - mean) * lax.rsqrt(var + _EPS)
    o_ref[...] = jnp.maximum(xhat * g_ref[...] + be_ref[...], 0.0).astype(o_ref.dtype)


def _head_kernel(x_ref, w1_ref, b1_ref, w2_ref, b2_ref, o_ref):
    """Fused fc1 + ReLU + fc2 + log_softmax on 128-lane padded weights.

    Padded logit columns carry bias -1e30 so max/exp/sum over the 128 lanes equal the
    10-way log_softmax; the garbage tail is sliced off by the caller.
    """
    h = jnp.dot(x_ref[...], w1_ref[...], preferred_element_type=jnp.float32) + b1_ref[...]
    h = jnp.maximum(h, 0.0).astype(jnp.bfloat16)
    logits = jnp.dot(h, w2_ref[...], preferred_element_type=jnp.float32) + b2_ref[...]
    m = jnp.max(logits, axis=1, keepdims=True)
    s = logits - m
    lse = jnp.log(jnp.sum(jnp.exp(s), axis=1, keepdims=True))
    o_ref[...] = s - lse


# ---------------------------------------------------------------- kernel wrappers
def fused_block(patches, w, b, g, be):
    Cout = w.shape[0]
    M = patches.shape[2]
    return pl.pallas_call(
        _block_kernel,
        out_shape=jax.ShapeDtypeStruct((Cout, M), jnp.bfloat16),
        in_specs=[_VMEM] * 5,
        out_specs=_VMEM,
    )(patches, w, b.reshape(Cout, 1), g.reshape(Cout, 1), be.reshape(Cout, 1))


def fc_head(feat, w1p, b1p, w2p, b2p):
    B = feat.shape[0]
    return pl.pallas_call(
        _head_kernel,
        out_shape=jax.ShapeDtypeStruct((B, w2p.shape[1]), jnp.float32),
        in_specs=[_VMEM] * 5,
        out_specs=_VMEM,
    )(feat, w1p, b1p, w2p, b2p)


# ---------------------------------------------------------------- JAX glue (layout only)
def extract_pool_patches(x_cbhw, kh=3, kw=3):
    """(C, B, H, W) -> (4, C*kh*kw, B*Hp*Wp) pool-window-grouped im2col patches.

    Element [py*2+px, c*9+dy*3+dx, b*Hp*Wp+hp*Wp+wp] = x[c, b, 2*hp+py+dy, 2*wp+px+dx],
    i.e. the conv patch feeding pooled output (b, hp, wp) through window slot (py, px).
    K order (c, dy, dx) matches the PyTorch OIHW weight flatten; M order is (b, hp, wp).
    """
    C, B, H, W = x_cbhw.shape
    Ho, Wo = H - kh + 1, W - kw + 1
    Hp, Wp = Ho // 2, Wo // 2
    M = B * Hp * Wp
    wins = []
    for py in range(2):
        for px in range(2):
            taps = []
            for dy in range(kh):
                for dx in range(kw):
                    sl = x_cbhw[:, :, py + dy:py + dy + 2 * Hp:2,
                                px + dx:px + dx + 2 * Wp:2]          # (C, B, Hp, Wp)
                    taps.append(sl.reshape(C, 1, M))
            wins.append(jnp.concatenate(taps, axis=1).reshape(C * kh * kw, M))
    return jnp.stack(wins, axis=0), (B, Hp, Wp)


def forward(x, params):
    """x: (B, 3, 32, 32) NCHW float32 -> (B, 10) log-probabilities."""
    B = x.shape[0]
    x_cbhw = jnp.transpose(x, (1, 0, 2, 3)).astype(jnp.bfloat16)       # (3, B, 32, 32)

    # ---- block 1: conv(3->16, 3x3) -> maxpool2 -> BN -> ReLU   (one fused kernel)
    p1, (_, H1, W1) = extract_pool_patches(x_cbhw)                     # (4, 27, B*225)
    a1 = fused_block(p1, params["w1m"], params["b1"], params["g1"], params["be1"])
    a1_cbhw = a1.reshape(16, B, H1, W1)                                # free reshape

    # ---- block 2: conv(16->32, 3x3) -> maxpool2 -> BN -> ReLU  (one fused kernel)
    p2, (_, H2, W2) = extract_pool_patches(a1_cbhw)                    # (4, 144, B*36)
    a2 = fused_block(p2, params["w2m"], params["b2"], params["g2"], params["be2"])

    # ---- flatten in the PyTorch (c, h, w) order -> (B, 1152); tiny (<10 KB) permute.
    feat = a2.reshape(32, B, H2 * W2).transpose(1, 0, 2).reshape(B, 32 * H2 * W2)

    # ---- fused FC head on 128-lane padded weights, then drop the padded tail.
    out_pad = fc_head(feat, params["fw1p"], params["fb1p"],
                      params["fw2p"], params["fb2p"])                  # (B, 128)
    return out_pad[:, :_NUM_OUT]


# ---------------------------------------------------------------- pure-JAX reference
def ref_forward(x, params):
    def conv(y, w, b):
        out = lax.conv_general_dilated(y, w, (1, 1), "VALID",
                                       dimension_numbers=("NCHW", "OIHW", "NCHW"))
        return out + b.reshape(1, -1, 1, 1)

    def maxpool(y):
        B, C, H, W = y.shape
        Hp, Wp = H // 2, W // 2
        return y[:, :, :2 * Hp, :2 * Wp].reshape(B, C, Hp, 2, Wp, 2).max(axis=(3, 5))

    def bn_relu(y, g, b):
        mean = y.mean(axis=(0, 2, 3), keepdims=True)
        var = ((y - mean) ** 2).mean(axis=(0, 2, 3), keepdims=True)
        yh = (y - mean) * lax.rsqrt(var + _EPS)
        return jnp.maximum(yh * g.reshape(1, -1, 1, 1) + b.reshape(1, -1, 1, 1), 0.0)

    y = bn_relu(maxpool(conv(x, params["w1"], params["b1"])), params["g1"], params["be1"])
    y = bn_relu(maxpool(conv(y, params["w2"], params["b2"])), params["g2"], params["be2"])
    y = y.reshape(y.shape[0], -1)
    h = jnp.maximum(y @ params["fw1"] + params["fb1"], 0.0)
    logits = h @ params["fw2"] + params["fb2"]
    return jax.nn.log_softmax(logits, axis=1)


# ---------------------------------------------------------------- params
def init_params(key):
    ks = jax.random.split(key, 8)
    w1 = 0.10 * jax.random.normal(ks[0], (16, 3, 3, 3), jnp.float32)    # conv_sp1 (OIHW)
    b1 = 0.10 * jax.random.normal(ks[1], (16,), jnp.float32)
    w2 = 0.05 * jax.random.normal(ks[2], (32, 16, 3, 3), jnp.float32)   # conv_sp2 (OIHW)
    b2 = 0.10 * jax.random.normal(ks[3], (32,), jnp.float32)
    fw1 = 0.03 * jax.random.normal(ks[4], (1152, 32), jnp.float32)      # fc_sp1 (in, out)
    fb1 = 0.10 * jax.random.normal(ks[5], (32,), jnp.float32)
    fw2 = 0.10 * jax.random.normal(ks[6], (32, 10), jnp.float32)        # fc_sp2 (in, out)
    fb2 = 0.10 * jax.random.normal(ks[7], (10,), jnp.float32)
    g1, be1 = jnp.ones((16,), jnp.float32), jnp.zeros((16,), jnp.float32)
    g2, be2 = jnp.ones((32,), jnp.float32), jnp.zeros((32,), jnp.float32)

    # kernel-side parameter forms: bf16 matmul operands, K order (cin,dy,dx),
    # head weights padded once to 128-wide lane-dense slabs.
    fw1p = jnp.zeros((1152, 128), jnp.float32).at[:, :32].set(fw1).astype(jnp.bfloat16)
    fb1p = jnp.zeros((128,), jnp.float32).at[:32].set(fb1).reshape(1, 128)
    fw2p = jnp.zeros((128, 128), jnp.float32).at[:32, :10].set(fw2).astype(jnp.bfloat16)
    fb2p = jnp.full((128,), -1e30, jnp.float32).at[:10].set(fb2).reshape(1, 128)

    return dict(
        # f32 originals (reference path)
        w1=w1, b1=b1, w2=w2, b2=b2, g1=g1, be1=be1, g2=g2, be2=be2,
        fw1=fw1, fb1=fb1, fw2=fw2, fb2=fb2,
        # kernel path
        w1m=w1.reshape(16, 3 * 9).astype(jnp.bfloat16),      # (16, 27)
        w2m=w2.reshape(32, 16 * 9).astype(jnp.bfloat16),     # (32, 144)
        fw1p=fw1p, fb1p=fb1p, fw2p=fw2p, fb2p=fb2p,
    )


if __name__ == "__main__":
    key = jax.random.PRNGKey(0)
    kx, kp = jax.random.split(key)
    # fc_sp1 expects 1152 = 32*6*6 features => spatial input must be 32x32 (CIFAR-like)
    x = jax.random.normal(kx, (2, 3, 32, 32), jnp.float32)   # NCHW, batch=2
    params = init_params(kp)

    out = jax.block_until_ready(jax.jit(forward)(x, params))
    ref = jax.block_until_ready(ref_forward(x, params))

    assert out.shape == (2, 10), out.shape
    max_err = float(jnp.max(jnp.abs(out - ref)))
    assert jnp.allclose(out, ref, rtol=2e-2, atol=2e-2), max_err
    print("KERNEL_OK")
</pallas_src>

<mosaic_0001>
module attributes {stable_mosaic.version = 11 : i64} {
  func.func @_block_kernel(%arg0: memref<4x27x450xbf16, #tpu.memory_space<vmem>>, %arg1: memref<16x27xbf16, #tpu.memory_space<vmem>>, %arg2: memref<16x1xf32, #tpu.memory_space<vmem>>, %arg3: memref<16x1xf32, #tpu.memory_space<vmem>>, %arg4: memref<16x1xf32, #tpu.memory_space<vmem>>, %arg5: memref<16x450xbf16, #tpu.memory_space<vmem>>) attributes {dimension_semantics = [], scalar_prefetch = 0 : i64, scratch_operands = 0 : i64, tpu.core_type = #tpu.core_type<tc>} {
    %c0 = arith.constant 0 : index
    %c0_0 = arith.constant 0 : index
    %0 = vector.load %arg1[%c0, %c0_0] : memref<16x27xbf16, #tpu.memory_space<vmem>>, vector<16x27xbf16>
    %c0_1 = arith.constant 0 : index
    %c0_2 = arith.constant 0 : index
    %c0_3 = arith.constant 0 : index
    %1 = vector.load %arg0[%c0_1, %c0_2, %c0_3] : memref<4x27x450xbf16, #tpu.memory_space<vmem>>, vector<1x27x450xbf16>
    %2 = vector.shape_cast %1 : vector<1x27x450xbf16> to vector<27x450xbf16>
    %cst = arith.constant dense<0.000000e+00> : vector<16x450xf32>
    %3 = tpu.matmul %0, %2, %cst {dimension_numbers = #tpu.dot_dimension_numbers<[1], [0], [0], [1], [0, 0, 1, 1], [], []>} : vector<16x27xbf16>, vector<27x450xbf16>, vector<16x450xf32> -> vector<16x450xf32>
    %c1 = arith.constant 1 : index
    %c0_4 = arith.constant 0 : index
    %c0_5 = arith.constant 0 : index
    %4 = vector.load %arg0[%c1, %c0_4, %c0_5] : memref<4x27x450xbf16, #tpu.memory_space<vmem>>, vector<1x27x450xbf16>
    %5 = vector.shape_cast %4 : vector<1x27x450xbf16> to vector<27x450xbf16>
    %cst_6 = arith.constant dense<0.000000e+00> : vector<16x450xf32>
    %6 = tpu.matmul %0, %5, %cst_6 {dimension_numbers = #tpu.dot_dimension_numbers<[1], [0], [0], [1], [0, 0, 1, 1], [], []>} : vector<16x27xbf16>, vector<27x450xbf16>, vector<16x450xf32> -> vector<16x450xf32>
    %c2 = arith.constant 2 : index
    %c0_7 = arith.constant 0 : index
    %c0_8 = arith.constant 0 : index
    %7 = vector.load %arg0[%c2, %c0_7, %c0_8] : memref<4x27x450xbf16, #tpu.memory_space<vmem>>, vector<1x27x450xbf16>
    %8 = vector.shape_cast %7 : vector<1x27x450xbf16> to vector<27x450xbf16>
    %cst_9 = arith.constant dense<0.000000e+00> : vector<16x450xf32>
    %9 = tpu.matmul %0, %8, %cst_9 {dimension_numbers = #tpu.dot_dimension_numbers<[1], [0], [0], [1], [0, 0, 1, 1], [], []>} : vector<16x27xbf16>, vector<27x450xbf16>, vector<16x450xf32> -> vector<16x450xf32>
    %c3 = arith.constant 3 : index
    %c0_10 = arith.constant 0 : index
    %c0_11 = arith.constant 0 : index
    %10 = vector.load %arg0[%c3, %c0_10, %c0_11] : memref<4x27x450xbf16, #tpu.memory_space<vmem>>, vector<1x27x450xbf16>
    %11 = vector.shape_cast %10 : vector<1x27x450xbf16> to vector<27x450xbf16>
    %cst_12 = arith.constant dense<0.000000e+00> : vector<16x450xf32>
    %12 = tpu.matmul %0, %11, %cst_12 {dimension_numbers = #tpu.dot_dimension_numbers<[1], [0], [0], [1], [0, 0, 1, 1], [], []>} : vector<16x27xbf16>, vector<27x450xbf16>, vector<16x450xf32> -> vector<16x450xf32>
    %13 = arith.maximumf %3, %6 : vector<16x450xf32>
    %14 = arith.maximumf %9, %12 : vector<16x450xf32>
    %15 = arith.maximumf %13, %14 : vector<16x450xf32>
    %c0_13 = arith.constant 0 : index
    %c0_14 = arith.constant 0 : index
    %16 = vector.load %arg2[%c0_13, %c0_14] : memref<16x1xf32, #tpu.memory_space<vmem>>, vector<16x1xf32>
    %17 = vector.broadcast %16 : vector<16x1xf32> to vector<16x450xf32>
    %18 = arith.addf %15, %17 : vector<16x450xf32>
    %cst_15 = arith.constant dense<0.000000e+00> : vector<16xf32>
    %19 = vector.multi_reduction <add>, %18, %cst_15 [1] : vector<16x450xf32> to vector<16xf32>
    %20 = vector.shape_cast %19 : vector<16xf32> to vector<16x1xf32>
    %cst_16 = arith.constant 4.500000e+02 : f32
    %21 = vector.broadcast %cst_16 : f32 to vector<16x1xf32>
    %22 = arith.divf %20, %21 : vector<16x1xf32>
    %23 = vector.broadcast %22 : vector<16x1xf32> to vector<16x450xf32>
    %24 = arith.subf %18, %23 : vector<16x450xf32>
    %25 = arith.mulf %24, %24 : vector<16x450xf32>
    %cst_17 = arith.constant dense<0.000000e+00> : vector<16xf32>
    %26 = vector.multi_reduction <add>, %25, %cst_17 [1] : vector<16x450xf32> to vector<16xf32>
    %27 = vector.shape_cast %26 : vector<16xf32> to vector<16x1xf32>
    %cst_18 = arith.constant 4.500000e+02 : f32
    %28 = vector.broadcast %cst_18 : f32 to vector<16x1xf32>
    %29 = arith.divf %27, %28 : vector<16x1xf32>
    %30 = vector.broadcast %22 : vector<16x1xf32> to vector<16x450xf32>
    %31 = arith.subf %18, %30 : vector<16x450xf32>
    %cst_19 = arith.constant 9.99999974E-6 : f32
    %32 = vector.broadcast %cst_19 : f32 to vector<16x1xf32>
    %33 = arith.addf %29, %32 : vector<16x1xf32>
    %34 = math.rsqrt %33 : vector<16x1xf32>
    %35 = vector.broadcast %34 : vector<16x1xf32> to vector<16x450xf32>
    %36 = arith.mulf %31, %35 : vector<16x450xf32>
    %c0_20 = arith.constant 0 : index
    %c0_21 = arith.constant 0 : index
    %37 = vector.load %arg3[%c0_20, %c0_21] : memref<16x1xf32, #tpu.memory_space<vmem>>, vector<16x1xf32>
    %38 = vector.broadcast %37 : vector<16x1xf32> to vector<16x450xf32>
    %39 = arith.mulf %36, %38 : vector<16x450xf32>
    %c0_22 = arith.constant 0 : index
    %c0_23 = arith.constant 0 : index
    %40 = vector.load %arg4[%c0_22, %c0_23] : memref<16x1xf32, #tpu.memory_space<vmem>>, vector<16x1xf32>
    %41 = vector.broadcast %40 : vector<16x1xf32> to vector<16x450xf32>
    %42 = arith.addf %39, %41 : vector<16x450xf32>
    %cst_24 = arith.constant 0.000000e+00 : f32
    %43 = vector.broadcast %cst_24 : f32 to vector<16x450xf32>
    %44 = arith.maximumf %42, %43 : vector<16x450xf32>
    %45 = arith.truncf %44 : vector<16x450xf32> to vector<16x450xbf16>
    %c0_25 = arith.constant 0 : index
    %c0_26 = arith.constant 0 : index
    %46 = vector.load %arg5[%c0_25, %c0_26] : memref<16x450xbf16, #tpu.memory_space<vmem>>, vector<16x450xbf16>
    tpu.vector_store %arg5[%c0_25, %c0_26], %45 {strides = array<i32>} : memref<16x450xbf16, #tpu.memory_space<vmem>>, vector<16x450xbf16>,
    return
  }
}

module attributes {stable_mosaic.version = 11 : i64} {
  func.func @_block_kernel(%arg0: memref<4x144x72xbf16, #tpu.memory_space<vmem>>, %arg1: memref<32x144xbf16, #tpu.memory_space<vmem>>, %arg2: memref<32x1xf32, #tpu.memory_space<vmem>>, %arg3: memref<32x1xf32, #tpu.memory_space<vmem>>, %arg4: memref<32x1xf32, #tpu.memory_space<vmem>>, %arg5: memref<32x72xbf16, #tpu.memory_space<vmem>>) attributes {dimension_semantics = [], scalar_prefetch = 0 : i64, scratch_operands = 0 : i64, tpu.core_type = #tpu.core_type<tc>} {
    %c0 = arith.constant 0 : index
    %c0_0 = arith.constant 0 : index
    %0 = vector.load %arg1[%c0, %c0_0] : memref<32x144xbf16, #tpu.memory_space<vmem>>, vector<32x144xbf16>
    %c0_1 = arith.constant 0 : index
    %c0_2 = arith.constant 0 : index
    %c0_3 = arith.constant 0 : index
    %1 = vector.load %arg0[%c0_1, %c0_2, %c0_3] : memref<4x144x72xbf16, #tpu.memory_space<vmem>>, vector<1x144x72xbf16>
    %2 = vector.shape_cast %1 : vector<1x144x72xbf16> to vector<144x72xbf16>
    %cst = arith.constant dense<0.000000e+00> : vector<32x72xf32>
    %3 = tpu.matmul %0, %2, %cst {dimension_numbers = #tpu.dot_dimension_numbers<[1], [0], [0], [1], [0, 0, 1, 1], [], []>} : vector<32x144xbf16>, vector<144x72xbf16>, vector<32x72xf32> -> vector<32x72xf32>
    %c1 = arith.constant 1 : index
    %c0_4 = arith.constant 0 : index
    %c0_5 = arith.constant 0 : index
    %4 = vector.load %arg0[%c1, %c0_4, %c0_5] : memref<4x144x72xbf16, #tpu.memory_space<vmem>>, vector<1x144x72xbf16>
    %5 = vector.shape_cast %4 : vector<1x144x72xbf16> to vector<144x72xbf16>
    %cst_6 = arith.constant dense<0.000000e+00> : vector<32x72xf32>
    %6 = tpu.matmul %0, %5, %cst_6 {dimension_numbers = #tpu.dot_dimension_numbers<[1], [0], [0], [1], [0, 0, 1, 1], [], []>} : vector<32x144xbf16>, vector<144x72xbf16>, vector<32x72xf32> -> vector<32x72xf32>
    %c2 = arith.constant 2 : index
    %c0_7 = arith.constant 0 : index
    %c0_8 = arith.constant 0 : index
    %7 = vector.load %arg0[%c2, %c0_7, %c0_8] : memref<4x144x72xbf16, #tpu.memory_space<vmem>>, vector<1x144x72xbf16>
    %8 = vector.shape_cast %7 : vector<1x144x72xbf16> to vector<144x72xbf16>
    %cst_9 = arith.constant dense<0.000000e+00> : vector<32x72xf32>
    %9 = tpu.matmul %0, %8, %cst_9 {dimension_numbers = #tpu.dot_dimension_numbers<[1], [0], [0], [1], [0, 0, 1, 1], [], []>} : vector<32x144xbf16>, vector<144x72xbf16>, vector<32x72xf32> -> vector<32x72xf32>
    %c3 = arith.constant 3 : index
    %c0_10 = arith.constant 0 : index
    %c0_11 = arith.constant 0 : index
    %10 = vector.load %arg0[%c3, %c0_10, %c0_11] : memref<4x144x72xbf16, #tpu.memory_space<vmem>>, vector<1x144x72xbf16>
    %11 = vector.shape_cast %10 : vector<1x144x72xbf16> to vector<144x72xbf16>
    %cst_12 = arith.constant dense<0.000000e+00> : vector<32x72xf32>
    %12 = tpu.matmul %0, %11, %cst_12 {dimension_numbers = #tpu.dot_dimension_numbers<[1], [0], [0], [1], [0, 0, 1, 1], [], []>} : vector<32x144xbf16>, vector<144x72xbf16>, vector<32x72xf32> -> vector<32x72xf32>
    %13 = arith.maximumf %3, %6 : vector<32x72xf32>
    %14 = arith.maximumf %9, %12 : vector<32x72xf32>
    %15 = arith.maximumf %13, %14 : vector<32x72xf32>
    %c0_13 = arith.constant 0 : index
    %c0_14 = arith.constant 0 : index
    %16 = vector.load %arg2[%c0_13, %c0_14] : memref<32x1xf32, #tpu.memory_space<vmem>>, vector<32x1xf32>
    %17 = vector.broadcast %16 : vector<32x1xf32> to vector<32x72xf32>
    %18 = arith.addf %15, %17 : vector<32x72xf32>
    %cst_15 = arith.constant dense<0.000000e+00> : vector<32xf32>
    %19 = vector.multi_reduction <add>, %18, %cst_15 [1] : vector<32x72xf32> to vector<32xf32>
    %20 = vector.shape_cast %19 : vector<32xf32> to vector<32x1xf32>
    %cst_16 = arith.constant 7.200000e+01 : f32
    %21 = vector.broadcast %cst_16 : f32 to vector<32x1xf32>
    %22 = arith.divf %20, %21 : vector<32x1xf32>
    %23 = vector.broadcast %22 : vector<32x1xf32> to vector<32x72xf32>
    %24 = arith.subf %18, %23 : vector<32x72xf32>
    %25 = arith.mulf %24, %24 : vector<32x72xf32>
    %cst_17 = arith.constant dense<0.000000e+00> : vector<32xf32>
    %26 = vector.multi_reduction <add>, %25, %cst_17 [1] : vector<32x72xf32> to vector<32xf32>
    %27 = vector.shape_cast %26 : vector<32xf32> to vector<32x1xf32>
    %cst_18 = arith.constant 7.200000e+01 : f32
    %28 = vector.broadcast %cst_18 : f32 to vector<32x1xf32>
    %29 = arith.divf %27, %28 : vector<32x1xf32>
    %30 = vector.broadcast %22 : vector<32x1xf32> to vector<32x72xf32>
    %31 = arith.subf %18, %30 : vector<32x72xf32>
    %cst_19 = arith.constant 9.99999974E-6 : f32
    %32 = vector.broadcast %cst_19 : f32 to vector<32x1xf32>
    %33 = arith.addf %29, %32 : vector<32x1xf32>
    %34 = math.rsqrt %33 : vector<32x1xf32>
    %35 = vector.broadcast %34 : vector<32x1xf32> to vector<32x72xf32>
    %36 = arith.mulf %31, %35 : vector<32x72xf32>
    %c0_20 = arith.constant 0 : index
    %c0_21 = arith.constant 0 : index
    %37 = vector.load %arg3[%c0_20, %c0_21] : memref<32x1xf32, #tpu.memory_space<vmem>>, vector<32x1xf32>
    %38 = vector.broadcast %37 : vector<32x1xf32> to vector<32x72xf32>
    %39 = arith.mulf %36, %38 : vector<32x72xf32>
    %c0_22 = arith.constant 0 : index
    %c0_23 = arith.constant 0 : index
    %40 = vector.load %arg4[%c0_22, %c0_23] : memref<32x1xf32, #tpu.memory_space<vmem>>, vector<32x1xf32>
    %41 = vector.broadcast %40 : vector<32x1xf32> to vector<32x72xf32>
    %42 = arith.addf %39, %41 : vector<32x72xf32>
    %cst_24 = arith.constant 0.000000e+00 : f32
    %43 = vector.broadcast %cst_24 : f32 to vector<32x72xf32>
    %44 = arith.maximumf %42, %43 : vector<32x72xf32>
    %45 = arith.truncf %44 : vector<32x72xf32> to vector<32x72xbf16>
    %c0_25 = arith.constant 0 : index
    %c0_26 = arith.constant 0 : index
    %46 = vector.load %arg5[%c0_25, %c0_26] : memref<32x72xbf16, #tpu.memory_space<vmem>>, vector<32x72xbf16>
    tpu.vector_store %arg5[%c0_25, %c0_26], %45 {strides = array<i32>} : memref<32x72xbf16, #tpu.memory_space<vmem>>, vector<32x72xbf16>,
    return
  }
}

module attributes {stable_mosaic.version = 11 : i64} {
  func.func @_head_kernel(%arg0: memref<2x1152xbf16, #tpu.memory_space<vmem>>, %arg1: memref<1152x128xbf16, #tpu.memory_space<vmem>>, %arg2: memref<1x128xf32, #tpu.memory_space<vmem>>, %arg3: memref<128x128xbf16, #tpu.memory_space<vmem>>, %arg4: memref<1x128xf32, #tpu.memory_space<vmem>>, %arg5: memref<2x128xf32, #tpu.memory_space<vmem>>) attributes {dimension_semantics = [], scalar_prefetch = 0 : i64, scratch_operands = 0 : i64, tpu.core_type = #tpu.core_type<tc>} {
    %c0 = arith.constant 0 : index
    %c0_0 = arith.constant 0 : index
    %0 = vector.load %arg0[%c0, %c0_0] : memref<2x1152xbf16, #tpu.memory_space<vmem>>, vector<2x1152xbf16>
    %c0_1 = arith.constant 0 : index
    %c0_2 = arith.constant 0 : index
    %1 = vector.load %arg1[%c0_1, %c0_2] : memref<1152x128xbf16, #tpu.memory_space<vmem>>, vector<1152x128xbf16>
    %cst = arith.constant dense<0.000000e+00> : vector<2x128xf32>
    %2 = tpu.matmul %0, %1, %cst {dimension_numbers = #tpu.dot_dimension_numbers<[1], [0], [0], [1], [0, 0, 1, 1], [], []>} : vector<2x1152xbf16>, vector<1152x128xbf16>, vector<2x128xf32> -> vector<2x128xf32>
    %c0_3 = arith.constant 0 : index
    %c0_4 = arith.constant 0 : index
    %3 = vector.load %arg2[%c0_3, %c0_4] : memref<1x128xf32, #tpu.memory_space<vmem>>, vector<1x128xf32>
    %4 = vector.broadcast %3 : vector<1x128xf32> to vector<2x128xf32>
    %5 = arith.addf %2, %4 : vector<2x128xf32>
    %cst_5 = arith.constant 0.000000e+00 : f32
    %6 = vector.broadcast %cst_5 : f32 to vector<2x128xf32>
    %7 = arith.maximumf %5, %6 : vector<2x128xf32>
    %8 = arith.truncf %7 : vector<2x128xf32> to vector<2x128xbf16>
    %c0_6 = arith.constant 0 : index
    %c0_7 = arith.constant 0 : index
    %9 = vector.load %arg3[%c0_6, %c0_7] : memref<128x128xbf16, #tpu.memory_space<vmem>>, vector<128x128xbf16>
    %cst_8 = arith.constant dense<0.000000e+00> : vector<2x128xf32>
    %10 = tpu.matmul %8, %9, %cst_8 {dimension_numbers = #tpu.dot_dimension_numbers<[1], [0], [0], [1], [0, 0, 1, 1], [], []>} : vector<2x128xbf16>, vector<128x128xbf16>, vector<2x128xf32> -> vector<2x128xf32>
    %c0_9 = arith.constant 0 : index
    %c0_10 = arith.constant 0 : index
    %11 = vector.load %arg4[%c0_9, %c0_10] : memref<1x128xf32, #tpu.memory_space<vmem>>, vector<1x128xf32>
    %12 = vector.broadcast %11 : vector<1x128xf32> to vector<2x128xf32>
    %13 = arith.addf %10, %12 : vector<2x128xf32>
    %cst_11 = arith.constant dense<0xFF800000> : vector<2xf32>
    %14 = vector.multi_reduction <maximumf>, %13, %cst_11 [1] : vector<2x128xf32> to vector<2xf32>
    %15 = vector.shape_cast %14 : vector<2xf32> to vector<2x1xf32>
    %16 = vector.broadcast %15 : vector<2x1xf32> to vector<2x128xf32>
    %17 = arith.subf %13, %16 : vector<2x128xf32>
    %18 = math.exp %17 : vector<2x128xf32>
    %cst_12 = arith.constant dense<0.000000e+00> : vector<2xf32>
    %19 = vector.multi_reduction <add>, %18, %cst_12 [1] : vector<2x128xf32> to vector<2xf32>
    %20 = vector.shape_cast %19 : vector<2xf32> to vector<2x1xf32>
    %21 = math.log %20 : vector<2x1xf32>
    %22 = vector.broadcast %21 : vector<2x1xf32> to vector<2x128xf32>
    %23 = arith.subf %17, %22 : vector<2x128xf32>
    %c0_13 = arith.constant 0 : index
    %c0_14 = arith.constant 0 : index
    %24 = vector.load %arg5[%c0_13, %c0_14] : memref<2x128xf32, #tpu.memory_space<vmem>>, vector<2x128xf32>
    tpu.vector_store %arg5[%c0_13, %c0_14], %23 {strides = array<i32>} : memref<2x128xf32, #tpu.memory_space<vmem>>, vector<2x128xf32>,
    return
  }
}

</mosaic_0001>

<llo_original>
// kernel: forward.3
$region0: #{forward.3}
  #allocation0 [shape = 'u32[]', space=smem, size = 0x4, offset = 0x4, fixed_abs, tag = 'smem constant byte address 0x4 - core index']
  #allocation1 [shape = 'u32[144,128]{1,0:T(1,128)}', space=vmem, size = 0x12000, scoped, tag = 'internal scratch']
  %s0 = inlined_call_operand.vmem [shape: bf16[4,27,450], index: 0, kind: input, shape index: {}]
  %s1 = inlined_call_operand.vmem [shape: bf16[16,27], index: 1, kind: input, shape index: {}]
  %s2 = inlined_call_operand.vmem [shape: f32[16,1], index: 2, kind: input, shape index: {}]
  %s3 = inlined_call_operand.vmem [shape: f32[16,1], index: 3, kind: input, shape index: {}]
  %s4 = inlined_call_operand.vmem [shape: f32[16,1], index: 4, kind: input, shape index: {}]
  %s5 = inlined_call_operand.vmem [shape: bf16[16,450], index: 5, kind: output, shape index: {}]
  %s6 = sld [smem:[#allocation0]]
  $region30: #{forward.3} parent=0
    _
  %s8 = ssub.s32 1, %s6
  %s9 = scalar_select 0, %s8, %s6
  // Predicated region
  $region2: #{forward.3} parent=0 // pred_check
    _
  $region3: #{forward.3} parent=0 // pred_check_branch
    %11 = sbr.rel (0) target = $region5
  $region4: #{forward.3} parent=0 // pred_region
    _
  $region5: #{forward.3} parent=0 // pred_fallthru
    _
  // Predicated region
  $region6: #{forward.3} parent=0 // pred_check
    _
  $region7: #{forward.3} parent=0 // pred_check_branch
    %13 = sbr.rel (0) target = $region9
  $region8: #{forward.3} parent=0 // pred_region
    _
  $region9: #{forward.3} parent=0 // pred_fallthru
    _
  // Predicated region
  $region10: #{forward.3} parent=0 // pred_check
    _
  $region11: #{forward.3} parent=0 // pred_check_branch
    %15 = sbr.rel (0) target = $region13
  $region12: #{forward.3} parent=0 // pred_region
    _
  $region13: #{forward.3} parent=0 // pred_fallthru
    _
  // Predicated region
  $region14: #{forward.3} parent=0 // pred_check
    _
  $region15: #{forward.3} parent=0 // pred_check_branch
    %17 = sbr.rel (0) target = $region17
  $region16: #{forward.3} parent=0 // pred_region
    _
  $region17: #{forward.3} parent=0 // pred_fallthru
    _
  // Predicated region
  $region18: #{forward.3} parent=0 // pred_check
    _
  $region19: #{forward.3} parent=0 // pred_check_branch
    %19 = sbr.rel (0) target = $region21
  $region20: #{forward.3} parent=0 // pred_region
    _
  $region21: #{forward.3} parent=0 // pred_fallthru
    _
  %v21 = vld [vmem:[%s1] sm:$0xf]
  %v22 = vld [vmem:[%s1 + $0x4] sm:$0xf]
  %v23 = vld [vmem:[%s0] sm:$0xff]
  %v24 = vld [vmem:[%s0 + $0x8] sm:$0xff]
  %v25 = vld [vmem:[%s0 + $0x10] sm:$0xff]
  %v26 = vld [vmem:[%s0 + $0x18] sm:$0xff]
  %v27 = vld [vmem:[%s0 + $0x20] sm:$0xff]
  %v28 = vld [vmem:[%s0 + $0x28] sm:$0xff]
  %v29 = vld [vmem:[%s0 + $0x30] sm:$0x33]
  %v30 = vld [vmem:[%s0 + $0x38] sm:$0x33]
  %v33 = vunpack.c.l.b16 %v21
  %v34 = vunpack.c.l.b16 %v22
  %v35 = vpack.c.b16 %v34, %v33
  %v44 = vunpack.c.l.b16 %v23
  %v45 = vunpack.c.h.b16 %v23
  %v46 = vunpack.c.l.b16 %v24
  %v47 = vunpack.c.h.b16 %v24
  %v48 = vunpack.c.l.b16 %v25
  %v49 = vunpack.c.h.b16 %v25
  %v50 = vunpack.c.l.b16 %v26
  %v51 = vunpack.c.h.b16 %v26
  %v52 = vunpack.c.l.b16 %v27
  %v53 = vunpack.c.h.b16 %v27
  %v54 = vunpack.c.l.b16 %v28
  %v55 = vunpack.c.h.b16 %v28
  %v56 = vunpack.c.l.b16 %v29
  %v57 = vunpack.c.h.b16 %v29
  %v58 = vunpack.c.l.b16 %v30
  %v59 = vunpack.c.h.b16 %v30
  %v60 = vpack.c.b16 %v48, %v44
  %v61 = vpack.c.b16 %v49, %v45
  %v62 = vpack.c.b16 %v50, %v46
  %v63 = vpack.c.b16 %v51, %v47
  %v64 = vpack.c.b16 %v56, %v52
  %v65 = vpack.c.b16 %v57, %v53
  %v66 = vpack.c.b16 %v58, %v54
  %v67 = vpack.c.b16 %v59, %v55
  %vm72 = vcmask 220160
  %v74 = vsel %vm72, %v35, 0
  %vm76 = vcmask 1044480
  %vm77 = vcmask 1045504
  %v78 = vsel %vm76, 4294967295, 65535
  %v79 = vsel %vm77, %v78, 0
  %v81 = vand.u32 %v64, %v79
  %v84 = vand.u32 %v65, %v79
  %v87 = vand.u32 %v66, %v79
  %v90 = vand.u32 %v67, %v79
  %92 = vmatprep.subr.bf16.mxu0 %v61
  %93 = vmatpush1.bf16.msra.mxu0 %v60
  %94 = vmatprep.subr.bf16.mxu0 %v84
  %95 = vmatpush1.bf16.msra.mxu0 %v81
  %96 = vmatprep.subr.bf16.mxu0 0
  %97 = vmatpush1.bf16.msra.mxu0 0
  %98 = vmatprep.subr.bf16.mxu0 0
  %99 = vmatpush1.bf16.msra.mxu0 0
  %100 = vmatprep.subr.bf16.mxu0 0
  %101 = vmatpush1.bf16.msra.mxu0 0
  %102 = vmatprep.subr.bf16.mxu0 0
  %103 = vmatpush1.bf16.msra.mxu0 0
  %104 = vmatprep.subr.bf16.mxu0 0
  %105 = vmatpush1.bf16.msra.mxu0 0
  %106 = vmatprep.subr.bf16.mxu0 0
  %107 = vmatpush1.bf16.msra.mxu0 0
  %108 = vmatprep.subr.bf16.mxu0 0
  %109 = vmatpush1.bf16.msra.mxu0 0
  %110 = vmatprep.subr.bf16.mxu0 0
  %111 = vmatpush1.bf16.msra.mxu0 0
  %112 = vmatprep.subr.bf16.mxu0 0
  %113 = vmatpush1.bf16.msra.mxu0 0
  %114 = vmatprep.subr.bf16.mxu0 0
  %115 = vmatpush1.bf16.msra.mxu0 0
  %116 = vmatprep.subr.bf16.mxu0 0
  %117 = vmatpush1.bf16.msra.mxu0 0
  %118 = vmatprep.subr.bf16.mxu0 0
  %119 = vmatpush1.bf16.msra.mxu0 0
  %120 = vmatprep.subr.bf16.mxu0 0
  %121 = vmatpush1.bf16.msra.mxu0 0
  %122 = vmatprep.subr.bf16.mxu0 0
  %123 = vmatpush1.bf16.msra.mxu0 0
  %124 = vmatprep.mubr.bf16.mxu0 0
  %125 = vmatmul.mubr.bf16.gmra.mrb[0].mxu0 %v74
  %v126 = vpop.f32.mrb[0].mxu0
  %v127 = vadd.f32 0.0, %v126
  %v128 = vpop.f32.mrb[0].mxu0
  %v129 = vadd.f32 0.0, %v128
  %v130 = vpop.f32.mrb[0].mxu0
  %v131 = vadd.f32 0.0, %v130
  %v132 = vpop.f32.mrb[0].mxu0
  %v133 = vadd.f32 0.0, %v132
  %134 = vdwg.mxu0
  %135 = vmatprep.subr.bf16.mxu0 %v63
  %136 = vmatpush1.bf16.msra.mxu0 %v62
  %137 = vmatprep.subr.bf16.mxu0 %v90
  %138 = vmatpush1.bf16.msra.mxu0 %v87
  %139 = vmatprep.subr.bf16.mxu0 0
  %140 = vmatpush1.bf16.msra.mxu0 0
  %141 = vmatprep.subr.bf16.mxu0 0
  %142 = vmatpush1.bf16.msra.mxu0 0
  %143 = vmatprep.subr.bf16.mxu0 0
  %144 = vmatpush1.bf16.msra.mxu0 0
  %145 = vmatprep.subr.bf16.mxu0 0
  %146 = vmatpush1.bf16.msra.mxu0 0
  %147 = vmatprep.subr.bf16.mxu0 0
  %148 = vmatpush1.bf16.msra.mxu0 0
  %149 = vmatprep.subr.bf16.mxu0 0
  %150 = vmatpush1.bf16.msra.mxu0 0
  %151 = vmatprep.subr.bf16.mxu0 0
  %152 = vmatpush1.bf16.msra.mxu0 0
  %153 = vmatprep.subr.bf16.mxu0 0
  %154 = vmatpush1.bf16.msra.mxu0 0
  %155 = vmatprep.subr.bf16.mxu0 0
  %156 = vmatpush1.bf16.msra.mxu0 0
  %157 = vmatprep.subr.bf16.mxu0 0
  %158 = vmatpush1.bf16.msra.mxu0 0
  %159 = vmatprep.subr.bf16.mxu0 0
  %160 = vmatpush1.bf16.msra.mxu0 0
  %161 = vmatprep.subr.bf16.mxu0 0
  %162 = vmatpush1.bf16.msra.mxu0 0
  %163 = vmatprep.subr.bf16.mxu0 0
  %164 = vmatpush1.bf16.msra.mxu0 0
  %165 = vmatprep.subr.bf16.mxu0 0
  %166 = vmatpush1.bf16.msra.mxu0 0
  %167 = vmatprep.mubr.bf16.mxu0 0
  %168 = vmatmul.mubr.bf16.gmra.mrb[0].mxu0 %v74
  %v169 = vpop.f32.mrb[0].mxu0
  %v170 = vadd.f32 0.0, %v169
  %v171 = vpop.f32.mrb[0].mxu0
  %v172 = vadd.f32 0.0, %v171
  %v173 = vpop.f32.mrb[0].mxu0
  %v174 = vadd.f32 0.0, %v173
  %v175 = vpop.f32.mrb[0].mxu0
  %v176 = vadd.f32 0.0, %v175
  %177 = vdwg.mxu0
  %s178 = scalar_lea.vmem %s0, 64
  %v179 = vld [vmem:[%s178] sm:$0xff]
  %v180 = vld [vmem:[%s178 + $0x8] sm:$0xff]
  %v181 = vld [vmem:[%s178 + $0x10] sm:$0xff]
  %v182 = vld [vmem:[%s178 + $0x18] sm:$0xff]
  %v183 = vld [vmem:[%s178 + $0x20] sm:$0xff]
  %v184 = vld [vmem:[%s178 + $0x28] sm:$0xff]
  %v185 = vld [vmem:[%s178 + $0x30] sm:$0x33]
  %v186 = vld [vmem:[%s178 + $0x38] sm:$0x33]
  %v195 = vunpack.c.l.b16 %v179
  %v196 = vunpack.c.h.b16 %v179
  %v197 = vunpack.c.l.b16 %v180
  %v198 = vunpack.c.h.b16 %v180
  %v199 = vunpack.c.l.b16 %v181
  %v200 = vunpack.c.h.b16 %v181
  %v201 = vunpack.c.l.b16 %v182
  %v202 = vunpack.c.h.b16 %v182
  %v203 = vunpack.c.l.b16 %v183
  %v204 = vunpack.c.h.b16 %v183
  %v205 = vunpack.c.l.b16 %v184
  %v206 = vunpack.c.h.b16 %v184
  %v207 = vunpack.c.l.b16 %v185
  %v208 = vunpack.c.h.b16 %v185
  %v209 = vunpack.c.l.b16 %v186
  %v210 = vunpack.c.h.b16 %v186
  %v211 = vpack.c.b16 %v199, %v195
  %v212 = vpack.c.b16 %v200, %v196
  %v213 = vpack.c.b16 %v201, %v197
  %v214 = vpack.c.b16 %v202, %v198
  %v215 = vpack.c.b16 %v207, %v203
  %v216 = vpack.c.b16 %v208, %v204
  %v217 = vpack.c.b16 %v209, %v205
  %v218 = vpack.c.b16 %v210, %v206
  %v224 = vand.u32 %v215, %v79
  %v227 = vand.u32 %v216, %v79
  %v230 = vand.u32 %v217, %v79
  %v233 = vand.u32 %v218, %v79
  %235 = vmatprep.subr.bf16.mxu0 %v212
  %236 = vmatpush1.bf16.msra.mxu0 %v211
  %237 = vmatprep.subr.bf16.mxu0 %v227
  %238 = vmatpush1.bf16.msra.mxu0 %v224
  %239 = vmatprep.subr.bf16.mxu0 0
  %240 = vmatpush1.bf16.msra.mxu0 0
  %241 = vmatprep.subr.bf16.mxu0 0
  %242 = vmatpush1.bf16.msra.mxu0 0
  %243 = vmatprep.subr.bf16.mxu0 0
  %244 = vmatpush1.bf16.msra.mxu0 0
  %245 = vmatprep.subr.bf16.mxu0 0
  %246 = vmatpush1.bf16.msra.mxu0 0
  %247 = vmatprep.subr.bf16.mxu0 0
  %248 = vmatpush1.bf16.msra.mxu0 0
  %249 = vmatprep.subr.bf16.mxu0 0
  %250 = vmatpush1.bf16.msra.mxu0 0
  %251 = vmatprep.subr.bf16.mxu0 0
  %252 = vmatpush1.bf16.msra.mxu0 0
  %253 = vmatprep.subr.bf16.mxu0 0
  %254 = vmatpush1.bf16.msra.mxu0 0
  %255 = vmatprep.subr.bf16.mxu0 0
  %256 = vmatpush1.bf16.msra.mxu0 0
  %257 = vmatprep.subr.bf16.mxu0 0
  %258 = vmatpush1.bf16.msra.mxu0 0
  %259 = vmatprep.subr.bf16.mxu0 0
  %260 = vmatpush1.bf16.msra.mxu0 0
  %261 = vmatprep.subr.bf16.mxu0 0
  %262 = vmatpush1.bf16.msra.mxu0 0
  %263 = vmatprep.subr.bf16.mxu0 0
  %264 = vmatpush1.bf16.msra.mxu0 0
  %265 = vmatprep.subr.bf16.mxu0 0
  %266 = vmatpush1.bf16.msra.mxu0 0
  %267 = vmatprep.mubr.bf16.mxu0 0
  %268 = vmatmul.mubr.bf16.gmra.mrb[0].mxu0 %v74
  %v269 = vpop.f32.mrb[0].mxu0
  %v270 = vadd.f32 0.0, %v269
  %v271 = vpop.f32.mrb[0].mxu0
  %v272 = vadd.f32 0.0, %v271
  %v273 = vpop.f32.mrb[0].mxu0
  %v274 = vadd.f32 0.0, %v273
  %v275 = vpop.f32.mrb[0].mxu0
  %v276 = vadd.f32 0.0, %v275
  %277 = vdwg.mxu0
  %278 = vmatprep.subr.bf16.mxu0 %v214
  %279 = vmatpush1.bf16.msra.mxu0 %v213
  %280 = vmatprep.subr.bf16.mxu0 %v233
  %281 = vmatpush1.bf16.msra.mxu0 %v230
  %282 = vmatprep.subr.bf16.mxu0 0
  %283 = vmatpush1.bf16.msra.mxu0 0
  %284 = vmatprep.subr.bf16.mxu0 0
  %285 = vmatpush1.bf16.msra.mxu0 0
  %286 = vmatprep.subr.bf16.mxu0 0
  %287 = vmatpush1.bf16.msra.mxu0 0
  %288 = vmatprep.subr.bf16.mxu0 0
  %289 = vmatpush1.bf16.msra.mxu0 0
  %290 = vmatprep.subr.bf16.mxu0 0
  %291 = vmatpush1.bf16.msra.mxu0 0
  %292 = vmatprep.subr.bf16.mxu0 0
  %293 = vmatpush1.bf16.msra.mxu0 0
  %294 = vmatprep.subr.bf16.mxu0 0
  %295 = vmatpush1.bf16.msra.mxu0 0
  %296 = vmatprep.subr.bf16.mxu0 0
  %297 = vmatpush1.bf16.msra.mxu0 0
  %298 = vmatprep.subr.bf16.mxu0 0
  %299 = vmatpush1.bf16.msra.mxu0 0
  %300 = vmatprep.subr.bf16.mxu0 0
  %301 = vmatpush1.bf16.msra.mxu0 0
  %302 = vmatprep.subr.bf16.mxu0 0
  %303 = vmatpush1.bf16.msra.mxu0 0
  %304 = vmatprep.subr.bf16.mxu0 0
  %305 = vmatpush1.bf16.msra.mxu0 0
  %306 = vmatprep.subr.bf16.mxu0 0
  %307 = vmatpush1.bf16.msra.mxu0 0
  %308 = vmatprep.subr.bf16.mxu0 0
  %309 = vmatpush1.bf16.msra.mxu0 0
  %310 = vmatprep.mubr.bf16.mxu0 0
  %311 = vmatmul.mubr.bf16.gmra.mrb[0].mxu0 %v74
  %v312 = vpop.f32.mrb[0].mxu0
  %v313 = vadd.f32 0.0, %v312
  %v314 = vpop.f32.mrb[0].mxu0
  %v315 = vadd.f32 0.0, %v314
  %v316 = vpop.f32.mrb[0].mxu0
  %v317 = vadd.f32 0.0, %v316
  %v318 = vpop.f32.mrb[0].mxu0
  %v319 = vadd.f32 0.0, %v318
  %320 = vdwg.mxu0
  %s321 = scalar_lea.vmem %s0, 128
  %v322 = vld [vmem:[%s321] sm:$0xff]
  %v323 = vld [vmem:[%s321 + $0x8] sm:$0xff]
  %v324 = vld [vmem:[%s321 + $0x10] sm:$0xff]
  %v325 = vld [vmem:[%s321 + $0x18] sm:$0xff]
  %v326 = vld [vmem:[%s321 + $0x20] sm:$0xff]
  %v327 = vld [vmem:[%s321 + $0x28] sm:$0xff]
  %v328 = vld [vmem:[%s321 + $0x30] sm:$0x33]
  %v329 = vld [vmem:[%s321 + $0x38] sm:$0x33]
  %v338 = vunpack.c.l.b16 %v322
  %v339 = vunpack.c.h.b16 %v322
  %v340 = vunpack.c.l.b16 %v323
  %v341 = vunpack.c.h.b16 %v323
  %v342 = vunpack.c.l.b16 %v324
  %v343 = vunpack.c.h.b16 %v324
  %v344 = vunpack.c.l.b16 %v325
  %v345 = vunpack.c.h.b16 %v325
  %v346 = vunpack.c.l.b16 %v326
  %v347 = vunpack.c.h.b16 %v326
  %v348 = vunpack.c.l.b16 %v327
  %v349 = vunpack.c.h.b16 %v327
  %v350 = vunpack.c.l.b16 %v328
  %v351 = vunpack.c.h.b16 %v328
  %v352 = vunpack.c.l.b16 %v329
  %v353 = vunpack.c.h.b16 %v329
  %v354 = vpack.c.b16 %v342, %v338
  %v355 = vpack.c.b16 %v343, %v339
  %v356 = vpack.c.b16 %v344, %v340
  %v357 = vpack.c.b16 %v345, %v341
  %v358 = vpack.c.b16 %v350, %v346
  %v359 = vpack.c.b16 %v351, %v347
  %v360 = vpack.c.b16 %v352, %v348
  %v361 = vpack.c.b16 %v353, %v349
  %v367 = vand.u32 %v358, %v79
  %v370 = vand.u32 %v359, %v79
  %v373 = vand.u32 %v360, %v79
  %v376 = vand.u32 %v361, %v79
  %378 = vmatprep.subr.bf16.mxu0 %v355
  %379 = vmatpush1.bf16.msra.mxu0 %v354
  %380 = vmatprep.subr.bf16.mxu0 %v370
  %381 = vmatpush1.bf16.msra.mxu0 %v367
  %382 = vmatprep.subr.bf16.mxu0 0
  %383 = vmatpush1.bf16.msra.mxu0 0
  %384 = vmatprep.subr.bf16.mxu0 0
  %385 = vmatpush1.bf16.msra.mxu0 0
  %386 = vmatprep.subr.bf16.mxu0 0
  %387 = vmatpush1.bf16.msra.mxu0 0
  %388 = vmatprep.subr.bf16.mxu0 0
  %389 = vmatpush1.bf16.msra.mxu0 0
  %390 = vmatprep.subr.bf16.mxu0 0
  %391 = vmatpush1.bf16.msra.mxu0 0
  %392 = vmatprep.subr.bf16.mxu0 0
  %393 = vmatpush1.bf16.msra.mxu0 0
  %394 = vmatprep.subr.bf16.mxu0 0
  %395 = vmatpush1.bf16.msra.mxu0 0
  %396 = vmatprep.subr.bf16.mxu0 0
  %397 = vmatpush1.bf16.msra.mxu0 0
  %398 = vmatprep.subr.bf16.mxu0 0
  %399 = vmatpush1.bf16.msra.mxu0 0
  %400 = vmatprep.subr.bf16.mxu0 0
  %401 = vmatpush1.bf16.msra.mxu0 0
  %402 = vmatprep.subr.bf16.mxu0 0
  %403 = vmatpush1.bf16.msra.mxu0 0
  %404 = vmatprep.subr.bf16.mxu0 0
  %405 = vmatpush1.bf16.msra.mxu0 0
  %406 = vmatprep.subr.bf16.mxu0 0
  %407 = vmatpush1.bf16.msra.mxu0 0
  %408 = vmatprep.subr.bf16.mxu0 0
  %409 = vmatpush1.bf16.msra.mxu0 0
  %410 = vmatprep.mubr.bf16.mxu0 0
  %411 = vmatmul.mubr.bf16.gmra.mrb[0].mxu0 %v74
  %v412 = vpop.f32.mrb[0].mxu0
  %v413 = vadd.f32 0.0, %v412
  %v414 = vpop.f32.mrb[0].mxu0
  %v415 = vadd.f32 0.0, %v414
  %v416 = vpop.f32.mrb[0].mxu0
  %v417 = vadd.f32 0.0, %v416
  %v418 = vpop.f32.mrb[0].mxu0
  %v419 = vadd.f32 0.0, %v418
  %420 = vdwg.mxu0
  %421 = vmatprep.subr.bf16.mxu0 %v357
  %422 = vmatpush1.bf16.msra.mxu0 %v356
  %423 = vmatprep.subr.bf16.mxu0 %v376
  %424 = vmatpush1.bf16.msra.mxu0 %v373
  %425 = vmatprep.subr.bf16.mxu0 0
  %426 = vmatpush1.bf16.msra.mxu0 0
  %427 = vmatprep.subr.bf16.mxu0 0
  %428 = vmatpush1.bf16.msra.mxu0 0
  %429 = vmatprep.subr.bf16.mxu0 0
  %430 = vmatpush1.bf16.msra.mxu0 0
  %431 = vmatprep.subr.bf16.mxu0 0
  %432 = vmatpush1.bf16.msra.mxu0 0
  %433 = vmatprep.subr.bf16.mxu0 0
  %434 = vmatpush1.bf16.msra.mxu0 0
  %435 = vmatprep.subr.bf16.mxu0 0
  %436 = vmatpush1.bf16.msra.mxu0 0
  %437 = vmatprep.subr.bf16.mxu0 0
  %438 = vmatpush1.bf16.msra.mxu0 0
  %439 = vmatprep.subr.bf16.mxu0 0
  %440 = vmatpush1.bf16.msra.mxu0 0
  %441 = vmatprep.subr.bf16.mxu0 0
  %442 = vmatpush1.bf16.msra.mxu0 0
  %443 = vmatprep.subr.bf16.mxu0 0
  %444 = vmatpush1.bf16.msra.mxu0 0
  %445 = vmatprep.subr.bf16.mxu0 0
  %446 = vmatpush1.bf16.msra.mxu0 0
  %447 = vmatprep.subr.bf16.mxu0 0
  %448 = vmatpush1.bf16.msra.mxu0 0
  %449 = vmatprep.subr.bf16.mxu0 0
  %450 = vmatpush1.bf16.msra.mxu0 0
  %451 = vmatprep.subr.bf16.mxu0 0
  %452 = vmatpush1.bf16.msra.mxu0 0
  %453 = vmatprep.mubr.bf16.mxu0 0
  %454 = vmatmul.mubr.bf16.gmra.mrb[0].mxu0 %v74
  %v455 = vpop.f32.mrb[0].mxu0
  %v456 = vadd.f32 0.0, %v455
  %v457 = vpop.f32.mrb[0].mxu0
  %v458 = vadd.f32 0.0, %v457
  %v459 = vpop.f32.mrb[0].mxu0
  %v460 = vadd.f32 0.0, %v459
  %v461 = vpop.f32.mrb[0].mxu0
  %v462 = vadd.f32 0.0, %v461
  %463 = vdwg.mxu0
  %s464 = scalar_lea.vmem %s0, 192
  %v465 = vld [vmem:[%s464] sm:$0xff]
  %v466 = vld [vmem:[%s464 + $0x8] sm:$0xff]
  %v467 = vld [vmem:[%s464 + $0x10] sm:$0xff]
  %v468 = vld [vmem:[%s464 + $0x18] sm:$0xff]
  %v469 = vld [vmem:[%s464 + $0x20] sm:$0xff]
  %v470 = vld [vmem:[%s464 + $0x28] sm:$0xff]
  %v471 = vld [vmem:[%s464 + $0x30] sm:$0x33]
  %v472 = vld [vmem:[%s464 + $0x38] sm:$0x33]
  %v481 = vunpack.c.l.b16 %v465
  %v482 = vunpack.c.h.b16 %v465
  %v483 = vunpack.c.l.b16 %v466
  %v484 = vunpack.c.h.b16 %v466
  %v485 = vunpack.c.l.b16 %v467
  %v486 = vunpack.c.h.b16 %v467
  %v487 = vunpack.c.l.b16 %v468
  %v488 = vunpack.c.h.b16 %v468
  %v489 = vunpack.c.l.b16 %v469
  %v490 = vunpack.c.h.b16 %v469
  %v491 = vunpack.c.l.b16 %v470
  %v492 = vunpack.c.h.b16 %v470
  %v493 = vunpack.c.l.b16 %v471
  %v494 = vunpack.c.h.b16 %v471
  %v495 = vunpack.c.l.b16 %v472
  %v496 = vunpack.c.h.b16 %v472
  %v497 = vpack.c.b16 %v485, %v481
  %v498 = vpack.c.b16 %v486, %v482
  %v499 = vpack.c.b16 %v487, %v483
  %v500 = vpack.c.b16 %v488, %v484
  %v501 = vpack.c.b16 %v493, %v489
  %v502 = vpack.c.b16 %v494, %v490
  %v503 = vpack.c.b16 %v495, %v491
  %v504 = vpack.c.b16 %v496, %v492
  %v510 = vand.u32 %v501, %v79
  %v513 = vand.u32 %v502, %v79
  %v516 = vand.u32 %v503, %v79
  %v519 = vand.u32 %v504, %v79
  %521 = vmatprep.subr.bf16.mxu0 %v498
  %522 = vmatpush1.bf16.msra.mxu0 %v497
  %523 = vmatprep.subr.bf16.mxu0 %v513
  %524 = vmatpush1.bf16.msra.mxu0 %v510
  %525 = vmatprep.subr.bf16.mxu0 0
  %526 = vmatpush1.bf16.msra.mxu0 0
  %527 = vmatprep.subr.bf16.mxu0 0
  %528 = vmatpush1.bf16.msra.mxu0 0
  %529 = vmatprep.subr.bf16.mxu0 0
  %530 = vmatpush1.bf16.msra.mxu0 0
  %531 = vmatprep.subr.bf16.mxu0 0
  %532 = vmatpush1.bf16.msra.mxu0 0
  %533 = vmatprep.subr.bf16.mxu0 0
  %534 = vmatpush1.bf16.msra.mxu0 0
  %535 = vmatprep.subr.bf16.mxu0 0
  %536 = vmatpush1.bf16.msra.mxu0 0
  %537 = vmatprep.subr.bf16.mxu0 0
  %538 = vmatpush1.bf16.msra.mxu0 0
  %539 = vmatprep.subr.bf16.mxu0 0
  %540 = vmatpush1.bf16.msra.mxu0 0
  %541 = vmatprep.subr.bf16.mxu0 0
  %542 = vmatpush1.bf16.msra.mxu0 0
  %543 = vmatprep.subr.bf16.mxu0 0
  %544 = vmatpush1.bf16.msra.mxu0 0
  %545 = vmatprep.subr.bf16.mxu0 0
  %546 = vmatpush1.bf16.msra.mxu0 0
  %547 = vmatprep.subr.bf16.mxu0 0
  %548 = vmatpush1.bf16.msra.mxu0 0
  %549 = vmatprep.subr.bf16.mxu0 0
  %550 = vmatpush1.bf16.msra.mxu0 0
  %551 = vmatprep.subr.bf16.mxu0 0
  %552 = vmatpush1.bf16.msra.mxu0 0
  %553 = vmatprep.mubr.bf16.mxu0 0
  %554 = vmatmul.mubr.bf16.gmra.mrb[0].mxu0 %v74
  %v555 = vpop.f32.mrb[0].mxu0
  %v556 = vadd.f32 0.0, %v555
  %v557 = vpop.f32.mrb[0].mxu0
  %v558 = vadd.f32 0.0, %v557
  %v559 = vpop.f32.mrb[0].mxu0
  %v560 = vadd.f32 0.0, %v559
  %v561 = vpop.f32.mrb[0].mxu0
  %v562 = vadd.f32 0.0, %v561
  %563 = vdwg.mxu0
  %564 = vmatprep.subr.bf16.mxu0 %v500
  %565 = vmatpush1.bf16.msra.mxu0 %v499
  %566 = vmatprep.subr.bf16.mxu0 %v519
  %567 = vmatpush1.bf16.msra.mxu0 %v516
  %568 = vmatprep.subr.bf16.mxu0 0
  %569 = vmatpush1.bf16.msra.mxu0 0
  %570 = vmatprep.subr.bf16.mxu0 0
  %571 = vmatpush1.bf16.msra.mxu0 0
  %572 = vmatprep.subr.bf16.mxu0 0
  %573 = vmatpush1.bf16.msra.mxu0 0
  %574 = vmatprep.subr.bf16.mxu0 0
  %575 = vmatpush1.bf16.msra.mxu0 0
  %576 = vmatprep.subr.bf16.mxu0 0
  %577 = vmatpush1.bf16.msra.mxu0 0
  %578 = vmatprep.subr.bf16.mxu0 0
  %579 = vmatpush1.bf16.msra.mxu0 0
  %580 = vmatprep.subr.bf16.mxu0 0
  %581 = vmatpush1.bf16.msra.mxu0 0
  %582 = vmatprep.subr.bf16.mxu0 0
  %583 = vmatpush1.bf16.msra.mxu0 0
  %584 = vmatprep.subr.bf16.mxu0 0
  %585 = vmatpush1.bf16.msra.mxu0 0
  %586 = vmatprep.subr.bf16.mxu0 0
  %587 = vmatpush1.bf16.msra.mxu0 0
  %588 = vmatprep.subr.bf16.mxu0 0
  %589 = vmatpush1.bf16.msra.mxu0 0
  %590 = vmatprep.subr.bf16.mxu0 0
  %591 = vmatpush1.bf16.msra.mxu0 0
  %592 = vmatprep.subr.bf16.mxu0 0
  %593 = vmatpush1.bf16.msra.mxu0 0
  %594 = vmatprep.subr.bf16.mxu0 0
  %595 = vmatpush1.bf16.msra.mxu0 0
  %596 = vmatprep.mubr.bf16.mxu0 0
  %597 = vmatmul.mubr.bf16.gmra.mrb[0].mxu0 %v74
  %v598 = vpop.f32.mrb[0].mxu0
  %v599 = vadd.f32 0.0, %v598
  %v600 = vpop.f32.mrb[0].mxu0
  %v601 = vadd.f32 0.0, %v600
  %v602 = vpop.f32.mrb[0].mxu0
  %v603 = vadd.f32 0.0, %v602
  %v604 = vpop.f32.mrb[0].mxu0
  %v605 = vadd.f32 0.0, %v604
  %606 = vdwg.mxu0
  %v607 = vmax.f32 %v127, %v270
  %v608 = vmax.f32 %v129, %v272
  %v609 = vmax.f32 %v170, %v313
  %v610 = vmax.f32 %v172, %v315
  %v611 = vmax.f32 %v131, %v274
  %v612 = vmax.f32 %v133, %v276
  %v613 = vmax.f32 %v174, %v317
  %v614 = vmax.f32 %v176, %v319
  %v615 = vmax.f32 %v413, %v556
  %v616 = vmax.f32 %v415, %v558
  %v617 = vmax.f32 %v456, %v599
  %v618 = vmax.f32 %v458, %v601
  %v619 = vmax.f32 %v417, %v560
  %v620 = vmax.f32 %v419, %v562
  %v621 = vmax.f32 %v460, %v603
  %v622 = vmax.f32 %v462, %v605
  %v623 = vmax.f32 %v607, %v615
  %v624 = vmax.f32 %v608, %v616
  %v625 = vmax.f32 %v609, %v617
  %v626 = vmax.f32 %v610, %v618
  %v627 = vmax.f32 %v611, %v619
  %v628 = vmax.f32 %v612, %v620
  %v629 = vmax.f32 %v613, %v621
  %v630 = vmax.f32 %v614, %v622
  %v631 = vld [vmem:[%s2] sm:$0xff]
  %v632 = vld [vmem:[%s2 + $0x8] sm:$0xff]
  %634 = vset.pattern.permute.xlu0 0
  %635 = vperm.xlu0 %634, %v631
  %v636 = vpop.permute.xlu0 %635
  %639 = vset.pattern.permute.xlu0 0
  %640 = vperm.xlu0 %639, %v632
  %v641 = vpop.permute.xlu0 %640
  %v643 = vadd.f32 %v623, %v636
  %v644 = vadd.f32 %v624, %v636
  %v645 = vadd.f32 %v625, %v636
  %v646 = vadd.f32 %v626, %v636
  %v647 = vadd.f32 %v627, %v641
  %v648 = vadd.f32 %v628, %v641
  %v649 = vadd.f32 %v629, %v641
  %v650 = vadd.f32 %v630, %v641
  %v651 = vadd.f32 %v643, %v644
  %v652 = vadd.f32 %v651, %v645
  %vm653 = vcmask 539648
  %v654 = vsel %vm653, %v646, 0.0
  %v655 = vadd.f32 %v652, %v654
  %656 = vadd.xlane.f32.xlu0 %v655
  %v657 = vpop.xlane.xlu0 %656
  %v658 = vadd.f32 %v647, %v648
  %v659 = vadd.f32 %v658, %v649
  %v660 = vsel %vm653, %v650, 0.0
  %v661 = vadd.f32 %v659, %v660
  %662 = vadd.xlane.f32.xlu0 %v661
  %v663 = vpop.xlane.xlu0 %662
  %v664 = vrcp.pop 450.0
  %v665 = vmul.f32 %v657, %v664
  %v666 = vmul.f32 %v663, %v664
  %v667 = vsub.f32 %v643, %v665
  %v668 = vsub.f32 %v644, %v665
  %v669 = vsub.f32 %v645, %v665
  %v670 = vsub.f32 %v646, %v665
  %v671 = vsub.f32 %v647, %v666
  %v672 = vsub.f32 %v648, %v666
  %v673 = vsub.f32 %v649, %v666
  %v674 = vsub.f32 %v650, %v666
  %v675 = vmul.f32 %v667, %v667
  %v676 = vmul.f32 %v668, %v668
  %v677 = vmul.f32 %v669, %v669
  %v678 = vmul.f32 %v670, %v670
  %v679 = vmul.f32 %v671, %v671
  %v680 = vmul.f32 %v672, %v672
  %v681 = vmul.f32 %v673, %v673
  %v682 = vmul.f32 %v674, %v674
  %v683 = vadd.f32 %v675, %v676
  %v684 = vadd.f32 %v683, %v677
  %v685 = vsel %vm653, %v678, 0.0
  %v686 = vadd.f32 %v684, %v685
  %687 = vadd.xlane.f32.xlu0 %v686
  %v688 = vpop.xlane.xlu0 %687
  %v689 = vadd.f32 %v679, %v680
  %v690 = vadd.f32 %v689, %v681
  %v691 = vsel %vm653, %v682, 0.0
  %v692 = vadd.f32 %v690, %v691
  %693 = vadd.xlane.f32.xlu0 %v692
  %v694 = vpop.xlane.xlu0 %693
  %v695 = vmul.f32 %v688, %v664
  %v696 = vmul.f32 %v694, %v664
  %v697 = vadd.f32 %v695, 1e-05
  %v698 = vadd.f32 %v696, 1e-05
  %v699 = vrsqrt.pop %v697
  %v700 = vrsqrt.pop %v698
  %v701 = vmul.f32 %v667, %v699
  %v702 = vmul.f32 %v668, %v699
  %v703 = vmul.f32 %v669, %v699
  %v704 = vmul.f32 %v670, %v699
  %v705 = vmul.f32 %v671, %v700
  %v706 = vmul.f32 %v672, %v700
  %v707 = vmul.f32 %v673, %v700
  %v708 = vmul.f32 %v674, %v700
  %v709 = vld [vmem:[%s3] sm:$0xff]
  %v710 = vld [vmem:[%s3 + $0x8] sm:$0xff]
  %712 = vset.pattern.permute.xlu0 0
  %713 = vperm.xlu0 %712, %v709
  %v714 = vpop.permute.xlu0 %713
  %717 = vset.pattern.permute.xlu0 0
  %718 = vperm.xlu0 %717, %v710
  %v719 = vpop.permute.xlu0 %718
  %v721 = vmul.f32 %v701, %v714
  %v722 = vmul.f32 %v702, %v714
  %v723 = vmul.f32 %v703, %v714
  %v724 = vmul.f32 %v704, %v714
  %v725 = vmul.f32 %v705, %v719
  %v726 = vmul.f32 %v706, %v719
  %v727 = vmul.f32 %v707, %v719
  %v728 = vmul.f32 %v708, %v719
  %v729 = vld [vmem:[%s4] sm:$0xff]
  %v730 = vld [vmem:[%s4 + $0x8] sm:$0xff]
  %732 = vset.pattern.permute.xlu0 0
  %733 = vperm.xlu0 %732, %v729
  %v734 = vpop.permute.xlu0 %733
  %737 = vset.pattern.permute.xlu0 0
  %738 = vperm.xlu0 %737, %v730
  %v739 = vpop.permute.xlu0 %738
  %v741 = vadd.f32 %v721, %v734
  %v742 = vadd.f32 %v722, %v734
  %v743 = vadd.f32 %v723, %v734
  %v744 = vadd.f32 %v724, %v734
  %v745 = vadd.f32 %v725, %v739
  %v746 = vadd.f32 %v726, %v739
  %v747 = vadd.f32 %v727, %v739
  %v748 = vadd.f32 %v728, %v739
  %v749 = vmax.f32 %v741, 0.0
  %v750 = vmax.f32 %v742, 0.0
  %v751 = vmax.f32 %v743, 0.0
  %v752 = vmax.f32 %v744, 0.0
  %v753 = vmax.f32 %v745, 0.0
  %v754 = vmax.f32 %v746, 0.0
  %v755 = vmax.f32 %v747, 0.0
  %v756 = vmax.f32 %v748, 0.0
  %v757 = vpack.c.bf16 %v753, %v749
  %v758 = vpack.c.bf16 %v754, %v750
  %v759 = vpack.c.bf16 %v755, %v751
  %v760 = vpack.c.bf16 %v756, %v752
  %v765 = vunpack.c.l.b16 %v757
  %v766 = vunpack.c.l.b16 %v758
  %v767 = vunpack.c.l.b16 %v759
  %v768 = vunpack.c.l.b16 %v760
  %v769 = vunpack.c.h.b16 %v757
  %v770 = vunpack.c.h.b16 %v758
  %v771 = vunpack.c.h.b16 %v759
  %v772 = vunpack.c.h.b16 %v760
  %v773 = vpack.c.b16 %v766, %v765
  %v774 = vpack.c.b16 %v768, %v767
  %v775 = vpack.c.b16 %v770, %v769
  %v776 = vpack.c.b16 %v772, %v771
  %781 = vst [vmem:[%s5] sm:$0xff] %v773
  %vm782 = vcmask 1043456
  %vm783 = vcmask 539652
  %vm784 = vmor %vm783, %vm782
  %785 = vst.msk [vmem:[%s5 + $0x8] sm:$0xff] %vm784, %v774
  %786 = vst [vmem:[%s5 + $0x10] sm:$0xff] %v775
  %787 = vst.msk [vmem:[%s5 + $0x18] sm:$0xff] %vm784, %v776
  // Predicated region
  $region22: #{forward.3} parent=0 // pred_check
    _
  $region23: #{forward.3} parent=0 // pred_check_branch
    %789 = sbr.rel (0) target = $region25
  $region24: #{forward.3} parent=0 // pred_region
    _
  $region25: #{forward.3} parent=0 // pred_fallthru
    _
  // Predicated region
  $region26: #{forward.3} parent=0 // pred_check
    _
  $region27: #{forward.3} parent=0 // pred_check_branch
    %791 = sbr.rel (0) target = $region29
  $region28: #{forward.3} parent=0 // pred_region
    _
  $region29: #{forward.3} parent=0 // pred_fallthru
    _

// kernel: forward.4
$region0: #{forward.4}
  #allocation0 [shape = 'u32[]', space=smem, size = 0x4, offset = 0x4, fixed_abs, tag = 'smem constant byte address 0x4 - core index']
  #allocation1 [shape = 'u32[144,128]{1,0:T(1,128)}', space=vmem, size = 0x12000, scoped, tag = 'internal scratch']
  %s0 = inlined_call_operand.vmem [shape: bf16[4,144,72], index: 0, kind: input, shape index: {}]
  %s1 = inlined_call_operand.vmem [shape: bf16[32,144], index: 1, kind: input, shape index: {}]
  %s2 = inlined_call_operand.vmem [shape: f32[32,1], index: 2, kind: input, shape index: {}]
  %s3 = inlined_call_operand.vmem [shape: f32[32,1], index: 3, kind: input, shape index: {}]
  %s4 = inlined_call_operand.vmem [shape: f32[32,1], index: 4, kind: input, shape index: {}]
  %s5 = inlined_call_operand.vmem [shape: bf16[32,72], index: 5, kind: output, shape index: {}]
  %s6 = sld [smem:[#allocation0]]
  $region30: #{forward.4} parent=0
    _
  %s8 = ssub.s32 1, %s6
  %s9 = scalar_select 0, %s8, %s6
  // Predicated region
  $region2: #{forward.4} parent=0 // pred_check
    _
  $region3: #{forward.4} parent=0 // pred_check_branch
    %11 = sbr.rel (0) target = $region5
  $region4: #{forward.4} parent=0 // pred_region
    _
  $region5: #{forward.4} parent=0 // pred_fallthru
    _
  // Predicated region
  $region6: #{forward.4} parent=0 // pred_check
    _
  $region7: #{forward.4} parent=0 // pred_check_branch
    %13 = sbr.rel (0) target = $region9
  $region8: #{forward.4} parent=0 // pred_region
    _
  $region9: #{forward.4} parent=0 // pred_fallthru
    _
  // Predicated region
  $region10: #{forward.4} parent=0 // pred_check
    _
  $region11: #{forward.4} parent=0 // pred_check_branch
    %15 = sbr.rel (0) target = $region13
  $region12: #{forward.4} parent=0 // pred_region
    _
  $region13: #{forward.4} parent=0 // pred_fallthru
    _
  // Predicated region
  $region14: #{forward.4} parent=0 // pred_check
    _
  $region15: #{forward.4} parent=0 // pred_check_branch
    %17 = sbr.rel (0) target = $region17
  $region16: #{forward.4} parent=0 // pred_region
    _
  $region17: #{forward.4} parent=0 // pred_fallthru
    _
  // Predicated region
  $region18: #{forward.4} parent=0 // pred_check
    _
  $region19: #{forward.4} parent=0 // pred_check_branch
    %19 = sbr.rel (0) target = $region21
  $region20: #{forward.4} parent=0 // pred_region
    _
  $region21: #{forward.4} parent=0 // pred_fallthru
    _
  %v21 = vld [vmem:[%s1] sm:$0xff]
  %v22 = vld [vmem:[%s1 + $0x8] sm:$0xff]
  %v23 = vld [vmem:[%s1 + $0x10] sm:$0xff]
  %v24 = vld [vmem:[%s1 + $0x18] sm:$0xff]
  %v25 = vld [vmem:[%s0] sm:$0xf]
  %v26 = vld [vmem:[%s0 + $0x4] sm:$0xf]
  %v27 = vld [vmem:[%s0 + $0x8] sm:$0xf]
  %v28 = vld [vmem:[%s0 + $0xc] sm:$0xf]
  %v29 = vld [vmem:[%s0 + $0x10] sm:$0xf]
  %v30 = vld [vmem:[%s0 + $0x14] sm:$0xf]
  %v31 = vld [vmem:[%s0 + $0x18] sm:$0xf]
  %v32 = vld [vmem:[%s0 + $0x1c] sm:$0xf]
  %v33 = vld [vmem:[%s0 + $0x20] sm:$0xf]
  %v34 = vld [vmem:[%s0 + $0x24] sm:$0xf]
  %v35 = vld [vmem:[%s0 + $0x28] sm:$0xf]
  %v36 = vld [vmem:[%s0 + $0x2c] sm:$0xf]
  %v37 = vld [vmem:[%s0 + $0x30] sm:$0xf]
  %v38 = vld [vmem:[%s0 + $0x34] sm:$0xf]
  %v39 = vld [vmem:[%s0 + $0x38] sm:$0xf]
  %v40 = vld [vmem:[%s0 + $0x3c] sm:$0xf]
  %v41 = vld [vmem:[%s0 + $0x40] sm:$0xf]
  %v42 = vld [vmem:[%s0 + $0x44] sm:$0xf]
  %v47 = vunpack.c.l.b16 %v21
  %v48 = vunpack.c.h.b16 %v21
  %v49 = vunpack.c.l.b16 %v22
  %v50 = vunpack.c.h.b16 %v22
  %v51 = vunpack.c.l.b16 %v23
  %v52 = vunpack.c.h.b16 %v23
  %v53 = vunpack.c.l.b16 %v24
  %v54 = vunpack.c.h.b16 %v24
  %v55 = vpack.c.b16 %v49, %v47
  %v56 = vpack.c.b16 %v50, %v48
  %v57 = vpack.c.b16 %v53, %v51
  %v58 = vpack.c.b16 %v54, %v52
  %v79 = vunpack.c.l.b16 %v25
  %v80 = vunpack.c.l.b16 %v26
  %v81 = vunpack.c.l.b16 %v27
  %v82 = vunpack.c.l.b16 %v28
  %v83 = vunpack.c.l.b16 %v29
  %v84 = vunpack.c.l.b16 %v30
  %v85 = vunpack.c.l.b16 %v31
  %v86 = vunpack.c.l.b16 %v32
  %v87 = vunpack.c.l.b16 %v33
  %v88 = vunpack.c.l.b16 %v34
  %v89 = vunpack.c.l.b16 %v35
  %v90 = vunpack.c.l.b16 %v36
  %v91 = vunpack.c.l.b16 %v37
  %v92 = vunpack.c.l.b16 %v38
  %v93 = vunpack.c.l.b16 %v39
  %v94 = vunpack.c.l.b16 %v40
  %v95 = vunpack.c.l.b16 %v41
  %v96 = vunpack.c.l.b16 %v42
  %v97 = vpack.c.b16 %v80, %v79
  %v98 = vpack.c.b16 %v82, %v81
  %v99 = vpack.c.b16 %v84, %v83
  %v100 = vpack.c.b16 %v86, %v85
  %v101 = vpack.c.b16 %v88, %v87
  %v102 = vpack.c.b16 %v90, %v89
  %v103 = vpack.c.b16 %v92, %v91
  %v104 = vpack.c.b16 %v94, %v93
  %v105 = vpack.c.b16 %v96, %v95
  %vm115 = vcmask 130048
  %v117 = vsel %vm115, %v56, 0
  %v120 = vsel %vm115, %v58, 0
  %122 = vmatprep.subr.bf16.mxu0 0
  %123 = vmatpush1.bf16.msra.mxu0 %v97
  %124 = vmatprep.subr.bf16.mxu0 0
  %125 = vmatpush1.bf16.msra.mxu0 %v98
  %126 = vmatprep.subr.bf16.mxu0 0
  %127 = vmatpush1.bf16.msra.mxu0 %v99
  %128 = vmatprep.subr.bf16.mxu0 0
  %129 = vmatpush1.bf16.msra.mxu0 %v100
  %130 = vmatprep.subr.bf16.mxu0 0
  %131 = vmatpush1.bf16.msra.mxu0 %v101
  %132 = vmatprep.subr.bf16.mxu0 0
  %133 = vmatpush1.bf16.msra.mxu0 %v102
  %134 = vmatprep.subr.bf16.mxu0 0
  %135 = vmatpush1.bf16.msra.mxu0 %v103
  %136 = vmatprep.subr.bf16.mxu0 0
  %137 = vmatpush1.bf16.msra.mxu0 %v104
  %138 = vmatprep.subr.bf16.mxu0 0
  %139 = vmatpush1.bf16.msra.mxu0 %v105
  %140 = vmatprep.subr.bf16.mxu0 0
  %141 = vmatpush1.bf16.msra.mxu0 0
  %142 = vmatprep.subr.bf16.mxu0 0
  %143 = vmatpush1.bf16.msra.mxu0 0
  %144 = vmatprep.subr.bf16.mxu0 0
  %145 = vmatpush1.bf16.msra.mxu0 0
  %146 = vmatprep.subr.bf16.mxu0 0
  %147 = vmatpush1.bf16.msra.mxu0 0
  %148 = vmatprep.subr.bf16.mxu0 0
  %149 = vmatpush1.bf16.msra.mxu0 0
  %150 = vmatprep.subr.bf16.mxu0 0
  %151 = vmatpush1.bf16.msra.mxu0 0
  %152 = vmatprep.subr.bf16.mxu0 0
  %153 = vmatpush1.bf16.msra.mxu0 0
  %154 = vmatprep.mubr.bf16.mxu0 %v117
  %155 = vmatmul.mubr.bf16.gmra.mrb[0].mxu0 %v55
  %v156 = vpop.f32.mrb[0].mxu0
  %v157 = vadd.f32 0.0, %v156
  %v158 = vpop.f32.mrb[0].mxu0
  %v159 = vpop.f32.mrb[0].mxu0
  %v160 = vadd.f32 0.0, %v159
  %v161 = vpop.f32.mrb[0].mxu0
  %162 = vmatprep.mubr.bf16.mxu0 %v120
  %163 = vmatmul.mubr.bf16.gmra.mrb[0].mxu0 %v57
  %v164 = vpop.f32.mrb[0].mxu0
  %v165 = vadd.f32 0.0, %v164
  %v166 = vpop.f32.mrb[0].mxu0
  %v167 = vpop.f32.mrb[0].mxu0
  %v168 = vadd.f32 0.0, %v167
  %v169 = vpop.f32.mrb[0].mxu0
  %170 = vdwg.mxu0
  %s171 = scalar_lea.vmem %s0, 72
  %v172 = vld [vmem:[%s171] sm:$0xf]
  %v173 = vld [vmem:[%s171 + $0x4] sm:$0xf]
  %v174 = vld [vmem:[%s171 + $0x8] sm:$0xf]
  %v175 = vld [vmem:[%s171 + $0xc] sm:$0xf]
  %v176 = vld [vmem:[%s171 + $0x10] sm:$0xf]
  %v177 = vld [vmem:[%s171 + $0x14] sm:$0xf]
  %v178 = vld [vmem:[%s171 + $0x18] sm:$0xf]
  %v179 = vld [vmem:[%s171 + $0x1c] sm:$0xf]
  %v180 = vld [vmem:[%s171 + $0x20] sm:$0xf]
  %v181 = vld [vmem:[%s171 + $0x24] sm:$0xf]
  %v182 = vld [vmem:[%s171 + $0x28] sm:$0xf]
  %v183 = vld [vmem:[%s171 + $0x2c] sm:$0xf]
  %v184 = vld [vmem:[%s171 + $0x30] sm:$0xf]
  %v185 = vld [vmem:[%s171 + $0x34] sm:$0xf]
  %v186 = vld [vmem:[%s171 + $0x38] sm:$0xf]
  %v187 = vld [vmem:[%s171 + $0x3c] sm:$0xf]
  %v188 = vld [vmem:[%s171 + $0x40] sm:$0xf]
  %v189 = vld [vmem:[%s171 + $0x44] sm:$0xf]
  %v208 = vunpack.c.l.b16 %v172
  %v209 = vunpack.c.l.b16 %v173
  %v210 = vunpack.c.l.b16 %v174
  %v211 = vunpack.c.l.b16 %v175
  %v212 = vunpack.c.l.b16 %v176
  %v213 = vunpack.c.l.b16 %v177
  %v214 = vunpack.c.l.b16 %v178
  %v215 = vunpack.c.l.b16 %v179
  %v216 = vunpack.c.l.b16 %v180
  %v217 = vunpack.c.l.b16 %v181
  %v218 = vunpack.c.l.b16 %v182
  %v219 = vunpack.c.l.b16 %v183
  %v220 = vunpack.c.l.b16 %v184
  %v221 = vunpack.c.l.b16 %v185
  %v222 = vunpack.c.l.b16 %v186
  %v223 = vunpack.c.l.b16 %v187
  %v224 = vunpack.c.l.b16 %v188
  %v225 = vunpack.c.l.b16 %v189
  %v226 = vpack.c.b16 %v209, %v208
  %v227 = vpack.c.b16 %v211, %v210
  %v228 = vpack.c.b16 %v213, %v212
  %v229 = vpack.c.b16 %v215, %v214
  %v230 = vpack.c.b16 %v217, %v216
  %v231 = vpack.c.b16 %v219, %v218
  %v232 = vpack.c.b16 %v221, %v220
  %v233 = vpack.c.b16 %v223, %v222
  %v234 = vpack.c.b16 %v225, %v224
  %244 = vmatprep.subr.bf16.mxu0 0
  %245 = vmatpush1.bf16.msra.mxu0 %v226
  %246 = vmatprep.subr.bf16.mxu0 0
  %247 = vmatpush1.bf16.msra.mxu0 %v227
  %248 = vmatprep.subr.bf16.mxu0 0
  %249 = vmatpush1.bf16.msra.mxu0 %v228
  %250 = vmatprep.subr.bf16.mxu0 0
  %251 = vmatpush1.bf16.msra.mxu0 %v229
  %252 = vmatprep.subr.bf16.mxu0 0
  %253 = vmatpush1.bf16.msra.mxu0 %v230
  %254 = vmatprep.subr.bf16.mxu0 0
  %255 = vmatpush1.bf16.msra.mxu0 %v231
  %256 = vmatprep.subr.bf16.mxu0 0
  %257 = vmatpush1.bf16.msra.mxu0 %v232
  %258 = vmatprep.subr.bf16.mxu0 0
  %259 = vmatpush1.bf16.msra.mxu0 %v233
  %260 = vmatprep.subr.bf16.mxu0 0
  %261 = vmatpush1.bf16.msra.mxu0 %v234
  %262 = vmatprep.subr.bf16.mxu0 0
  %263 = vmatpush1.bf16.msra.mxu0 0
  %264 = vmatprep.subr.bf16.mxu0 0
  %265 = vmatpush1.bf16.msra.mxu0 0
  %266 = vmatprep.subr.bf16.mxu0 0
  %267 = vmatpush1.bf16.msra.mxu0 0
  %268 = vmatprep.subr.bf16.mxu0 0
  %269 = vmatpush1.bf16.msra.mxu0 0
  %270 = vmatprep.subr.bf16.mxu0 0
  %271 = vmatpush1.bf16.msra.mxu0 0
  %272 = vmatprep.subr.bf16.mxu0 0
  %273 = vmatpush1.bf16.msra.mxu0 0
  %274 = vmatprep.subr.bf16.mxu0 0
  %275 = vmatpush1.bf16.msra.mxu0 0
  %276 = vmatprep.mubr.bf16.mxu0 %v117
  %277 = vmatmul.mubr.bf16.gmra.mrb[0].mxu0 %v55
  %v278 = vpop.f32.mrb[0].mxu0
  %v279 = vadd.f32 0.0, %v278
  %v280 = vpop.f32.mrb[0].mxu0
  %v281 = vpop.f32.mrb[0].mxu0
  %v282 = vadd.f32 0.0, %v281
  %v283 = vpop.f32.mrb[0].mxu0
  %284 = vmatprep.mubr.bf16.mxu0 %v120
  %285 = vmatmul.mubr.bf16.gmra.mrb[0].mxu0 %v57
  %v286 = vpop.f32.mrb[0].mxu0
  %v287 = vadd.f32 0.0, %v286
  %v288 = vpop.f32.mrb[0].mxu0
  %v289 = vpop.f32.mrb[0].mxu0
  %v290 = vadd.f32 0.0, %v289
  %v291 = vpop.f32.mrb[0].mxu0
  %292 = vdwg.mxu0
  %s293 = scalar_lea.vmem %s0, 144
  %v294 = vld [vmem:[%s293] sm:$0xf]
  %v295 = vld [vmem:[%s293 + $0x4] sm:$0xf]
  %v296 = vld [vmem:[%s293 + $0x8] sm:$0xf]
  %v297 = vld [vmem:[%s293 + $0xc] sm:$0xf]
  %v298 = vld [vmem:[%s293 + $0x10] sm:$0xf]
  %v299 = vld [vmem:[%s293 + $0x14] sm:$0xf]
  %v300 = vld [vmem:[%s293 + $0x18] sm:$0xf]
  %v301 = vld [vmem:[%s293 + $0x1c] sm:$0xf]
  %v302 = vld [vmem:[%s293 + $0x20] sm:$0xf]
  %v303 = vld [vmem:[%s293 + $0x24] sm:$0xf]
  %v304 = vld [vmem:[%s293 + $0x28] sm:$0xf]
  %v305 = vld [vmem:[%s293 + $0x2c] sm:$0xf]
  %v306 = vld [vmem:[%s293 + $0x30] sm:$0xf]
  %v307 = vld [vmem:[%s293 + $0x34] sm:$0xf]
  %v308 = vld [vmem:[%s293 + $0x38] sm:$0xf]
  %v309 = vld [vmem:[%s293 + $0x3c] sm:$0xf]
  %v310 = vld [vmem:[%s293 + $0x40] sm:$0xf]
  %v311 = vld [vmem:[%s293 + $0x44] sm:$0xf]
  %v330 = vunpack.c.l.b16 %v294
  %v331 = vunpack.c.l.b16 %v295
  %v332 = vunpack.c.l.b16 %v296
  %v333 = vunpack.c.l.b16 %v297
  %v334 = vunpack.c.l.b16 %v298
  %v335 = vunpack.c.l.b16 %v299
  %v336 = vunpack.c.l.b16 %v300
  %v337 = vunpack.c.l.b16 %v301
  %v338 = vunpack.c.l.b16 %v302
  %v339 = vunpack.c.l.b16 %v303
  %v340 = vunpack.c.l.b16 %v304
  %v341 = vunpack.c.l.b16 %v305
  %v342 = vunpack.c.l.b16 %v306
  %v343 = vunpack.c.l.b16 %v307
  %v344 = vunpack.c.l.b16 %v308
  %v345 = vunpack.c.l.b16 %v309
  %v346 = vunpack.c.l.b16 %v310
  %v347 = vunpack.c.l.b16 %v311
  %v348 = vpack.c.b16 %v331, %v330
  %v349 = vpack.c.b16 %v333, %v332
  %v350 = vpack.c.b16 %v335, %v334
  %v351 = vpack.c.b16 %v337, %v336
  %v352 = vpack.c.b16 %v339, %v338
  %v353 = vpack.c.b16 %v341, %v340
  %v354 = vpack.c.b16 %v343, %v342
  %v355 = vpack.c.b16 %v345, %v344
  %v356 = vpack.c.b16 %v347, %v346
  %366 = vmatprep.subr.bf16.mxu0 0
  %367 = vmatpush1.bf16.msra.mxu0 %v348
  %368 = vmatprep.subr.bf16.mxu0 0
  %369 = vmatpush1.bf16.msra.mxu0 %v349
  %370 = vmatprep.subr.bf16.mxu0 0
  %371 = vmatpush1.bf16.msra.mxu0 %v350
  %372 = vmatprep.subr.bf16.mxu0 0
  %373 = vmatpush1.bf16.msra.mxu0 %v351
  %374 = vmatprep.subr.bf16.mxu0 0
  %375 = vmatpush1.bf16.msra.mxu0 %v352
  %376 = vmatprep.subr.bf16.mxu0 0
  %377 = vmatpush1.bf16.msra.mxu0 %v353
  %378 = vmatprep.subr.bf16.mxu0 0
  %379 = vmatpush1.bf16.msra.mxu0 %v354
  %380 = vmatprep.subr.bf16.mxu0 0
  %381 = vmatpush1.bf16.msra.mxu0 %v355
  %382 = vmatprep.subr.bf16.mxu0 0
  %383 = vmatpush1.bf16.msra.mxu0 %v356
  %384 = vmatprep.subr.bf16.mxu0 0
  %385 = vmatpush1.bf16.msra.mxu0 0
  %386 = vmatprep.subr.bf16.mxu0 0
  %387 = vmatpush1.bf16.msra.mxu0 0
  %388 = vmatprep.subr.bf16.mxu0 0
  %389 = vmatpush1.bf16.msra.mxu0 0
  %390 = vmatprep.subr.bf16.mxu0 0
  %391 = vmatpush1.bf16.msra.mxu0 0
  %392 = vmatprep.subr.bf16.mxu0 0
  %393 = vmatpush1.bf16.msra.mxu0 0
  %394 = vmatprep.subr.bf16.mxu0 0
  %395 = vmatpush1.bf16.msra.mxu0 0
  %396 = vmatprep.subr.bf16.mxu0 0
  %397 = vmatpush1.bf16.msra.mxu0 0
  %398 = vmatprep.mubr.bf16.mxu0 %v117
  %399 = vmatmul.mubr.bf16.gmra.mrb[0].mxu0 %v55
  %v400 = vpop.f32.mrb[0].mxu0
  %v401 = vadd.f32 0.0, %v400
  %v402 = vpop.f32.mrb[0].mxu0
  %v403 = vpop.f32.mrb[0].mxu0
  %v404 = vadd.f32 0.0, %v403
  %v405 = vpop.f32.mrb[0].mxu0
  %406 = vmatprep.mubr.bf16.mxu0 %v120
  %407 = vmatmul.mubr.bf16.gmra.mrb[0].mxu0 %v57
  %v408 = vpop.f32.mrb[0].mxu0
  %v409 = vadd.f32 0.0, %v408
  %v410 = vpop.f32.mrb[0].mxu0
  %v411 = vpop.f32.mrb[0].mxu0
  %v412 = vadd.f32 0.0, %v411
  %v413 = vpop.f32.mrb[0].mxu0
  %414 = vdwg.mxu0
  %s415 = scalar_lea.vmem %s0, 216
  %v416 = vld [vmem:[%s415] sm:$0xf]
  %v417 = vld [vmem:[%s415 + $0x4] sm:$0xf]
  %v418 = vld [vmem:[%s415 + $0x8] sm:$0xf]
  %v419 = vld [vmem:[%s415 + $0xc] sm:$0xf]
  %v420 = vld [vmem:[%s415 + $0x10] sm:$0xf]
  %v421 = vld [vmem:[%s415 + $0x14] sm:$0xf]
  %v422 = vld [vmem:[%s415 + $0x18] sm:$0xf]
  %v423 = vld [vmem:[%s415 + $0x1c] sm:$0xf]
  %v424 = vld [vmem:[%s415 + $0x20] sm:$0xf]
  %v425 = vld [vmem:[%s415 + $0x24] sm:$0xf]
  %v426 = vld [vmem:[%s415 + $0x28] sm:$0xf]
  %v427 = vld [vmem:[%s415 + $0x2c] sm:$0xf]
  %v428 = vld [vmem:[%s415 + $0x30] sm:$0xf]
  %v429 = vld [vmem:[%s415 + $0x34] sm:$0xf]
  %v430 = vld [vmem:[%s415 + $0x38] sm:$0xf]
  %v431 = vld [vmem:[%s415 + $0x3c] sm:$0xf]
  %v432 = vld [vmem:[%s415 + $0x40] sm:$0xf]
  %v433 = vld [vmem:[%s415 + $0x44] sm:$0xf]
  %v452 = vunpack.c.l.b16 %v416
  %v453 = vunpack.c.l.b16 %v417
  %v454 = vunpack.c.l.b16 %v418
  %v455 = vunpack.c.l.b16 %v419
  %v456 = vunpack.c.l.b16 %v420
  %v457 = vunpack.c.l.b16 %v421
  %v458 = vunpack.c.l.b16 %v422
  %v459 = vunpack.c.l.b16 %v423
  %v460 = vunpack.c.l.b16 %v424
  %v461 = vunpack.c.l.b16 %v425
  %v462 = vunpack.c.l.b16 %v426
  %v463 = vunpack.c.l.b16 %v427
  %v464 = vunpack.c.l.b16 %v428
  %v465 = vunpack.c.l.b16 %v429
  %v466 = vunpack.c.l.b16 %v430
  %v467 = vunpack.c.l.b16 %v431
  %v468 = vunpack.c.l.b16 %v432
  %v469 = vunpack.c.l.b16 %v433
  %v470 = vpack.c.b16 %v453, %v452
  %v471 = vpack.c.b16 %v455, %v454
  %v472 = vpack.c.b16 %v457, %v456
  %v473 = vpack.c.b16 %v459, %v458
  %v474 = vpack.c.b16 %v461, %v460
  %v475 = vpack.c.b16 %v463, %v462
  %v476 = vpack.c.b16 %v465, %v464
  %v477 = vpack.c.b16 %v467, %v466
  %v478 = vpack.c.b16 %v469, %v468
  %488 = vmatprep.subr.bf16.mxu0 0
  %489 = vmatpush1.bf16.msra.mxu0 %v470
  %490 = vmatprep.subr.bf16.mxu0 0
  %491 = vmatpush1.bf16.msra.mxu0 %v471
  %492 = vmatprep.subr.bf16.mxu0 0
  %493 = vmatpush1.bf16.msra.mxu0 %v472
  %494 = vmatprep.subr.bf16.mxu0 0
  %495 = vmatpush1.bf16.msra.mxu0 %v473
  %496 = vmatprep.subr.bf16.mxu0 0
  %497 = vmatpush1.bf16.msra.mxu0 %v474
  %498 = vmatprep.subr.bf16.mxu0 0
  %499 = vmatpush1.bf16.msra.mxu0 %v475
  %500 = vmatprep.subr.bf16.mxu0 0
  %501 = vmatpush1.bf16.msra.mxu0 %v476
  %502 = vmatprep.subr.bf16.mxu0 0
  %503 = vmatpush1.bf16.msra.mxu0 %v477
  %504 = vmatprep.subr.bf16.mxu0 0
  %505 = vmatpush1.bf16.msra.mxu0 %v478
  %506 = vmatprep.subr.bf16.mxu0 0
  %507 = vmatpush1.bf16.msra.mxu0 0
  %508 = vmatprep.subr.bf16.mxu0 0
  %509 = vmatpush1.bf16.msra.mxu0 0
  %510 = vmatprep.subr.bf16.mxu0 0
  %511 = vmatpush1.bf16.msra.mxu0 0
  %512 = vmatprep.subr.bf16.mxu0 0
  %513 = vmatpush1.bf16.msra.mxu0 0
  %514 = vmatprep.subr.bf16.mxu0 0
  %515 = vmatpush1.bf16.msra.mxu0 0
  %516 = vmatprep.subr.bf16.mxu0 0
  %517 = vmatpush1.bf16.msra.mxu0 0
  %518 = vmatprep.subr.bf16.mxu0 0
  %519 = vmatpush1.bf16.msra.mxu0 0
  %520 = vmatprep.mubr.bf16.mxu0 %v117
  %521 = vmatmul.mubr.bf16.gmra.mrb[0].mxu0 %v55
  %v522 = vpop.f32.mrb[0].mxu0
  %v523 = vadd.f32 0.0, %v522
  %v524 = vpop.f32.mrb[0].mxu0
  %v525 = vpop.f32.mrb[0].mxu0
  %v526 = vadd.f32 0.0, %v525
  %v527 = vpop.f32.mrb[0].mxu0
  %528 = vmatprep.mubr.bf16.mxu0 %v120
  %529 = vmatmul.mubr.bf16.gmra.mrb[0].mxu0 %v57
  %v530 = vpop.f32.mrb[0].mxu0
  %v531 = vadd.f32 0.0, %v530
  %v532 = vpop.f32.mrb[0].mxu0
  %v533 = vpop.f32.mrb[0].mxu0
  %v534 = vadd.f32 0.0, %v533
  %v535 = vpop.f32.mrb[0].mxu0
  %536 = vdwg.mxu0
  %v537 = vmax.f32 %v157, %v279
  %v538 = vmax.f32 %v160, %v282
  %v539 = vmax.f32 %v165, %v287
  %v540 = vmax.f32 %v168, %v290
  %v541 = vmax.f32 %v401, %v523
  %v542 = vmax.f32 %v404, %v526
  %v543 = vmax.f32 %v409, %v531
  %v544 = vmax.f32 %v412, %v534
  %v545 = vmax.f32 %v537, %v541
  %v546 = vmax.f32 %v538, %v542
  %v547 = vmax.f32 %v539, %v543
  %v548 = vmax.f32 %v540, %v544
  %v549 = vld [vmem:[%s2] sm:$0xff]
  %v550 = vld [vmem:[%s2 + $0x8] sm:$0xff]
  %v551 = vld [vmem:[%s2 + $0x10] sm:$0xff]
  %v552 = vld [vmem:[%s2 + $0x18] sm:$0xff]
  %554 = vset.pattern.permute.xlu0 0
  %555 = vperm.xlu0 %554, %v549
  %v556 = vpop.permute.xlu0 %555
  %559 = vset.pattern.permute.xlu0 0
  %560 = vperm.xlu0 %559, %v550
  %v561 = vpop.permute.xlu0 %560
  %564 = vset.pattern.permute.xlu0 0
  %565 = vperm.xlu0 %564, %v551
  %v566 = vpop.permute.xlu0 %565
  %569 = vset.pattern.permute.xlu0 0
  %570 = vperm.xlu0 %569, %v552
  %v571 = vpop.permute.xlu0 %570
  %v573 = vadd.f32 %v545, %v556
  %v574 = vadd.f32 %v546, %v561
  %v575 = vadd.f32 %v547, %v566
  %v576 = vadd.f32 %v548, %v571
  %vm577 = vcmask 588800
  %v578 = vsel %vm577, %v573, 0.0
  %579 = vadd.xlane.f32.xlu0 %v578
  %v580 = vpop.xlane.xlu0 %579
  %v581 = vsel %vm577, %v574, 0.0
  %582 = vadd.xlane.f32.xlu0 %v581
  %v583 = vpop.xlane.xlu0 %582
  %v584 = vsel %vm577, %v575, 0.0
  %585 = vadd.xlane.f32.xlu0 %v584
  %v586 = vpop.xlane.xlu0 %585
  %v587 = vsel %vm577, %v576, 0.0
  %588 = vadd.xlane.f32.xlu0 %v587
  %v589 = vpop.xlane.xlu0 %588
  %v590 = vrcp.pop 72.0
  %v591 = vmul.f32 %v580, %v590
  %v592 = vmul.f32 %v583, %v590
  %v593 = vmul.f32 %v586, %v590
  %v594 = vmul.f32 %v589, %v590
  %v595 = vsub.f32 %v573, %v591
  %v596 = vsub.f32 %v574, %v592
  %v597 = vsub.f32 %v575, %v593
  %v598 = vsub.f32 %v576, %v594
  %v599 = vmul.f32 %v595, %v595
  %v600 = vmul.f32 %v596, %v596
  %v601 = vmul.f32 %v597, %v597
  %v602 = vmul.f32 %v598, %v598
  %v603 = vsel %vm577, %v599, 0.0
  %604 = vadd.xlane.f32.xlu0 %v603
  %v605 = vpop.xlane.xlu0 %604
  %v606 = vsel %vm577, %v600, 0.0
  %607 = vadd.xlane.f32.xlu0 %v606
  %v608 = vpop.xlane.xlu0 %607
  %v609 = vsel %vm577, %v601, 0.0
  %610 = vadd.xlane.f32.xlu0 %v609
  %v611 = vpop.xlane.xlu0 %610
  %v612 = vsel %vm577, %v602, 0.0
  %613 = vadd.xlane.f32.xlu0 %v612
  %v614 = vpop.xlane.xlu0 %613
  %v615 = vmul.f32 %v605, %v590
  %v616 = vmul.f32 %v608, %v590
  %v617 = vmul.f32 %v611, %v590
  %v618 = vmul.f32 %v614, %v590
  %v619 = vadd.f32 %v615, 1e-05
  %v620 = vadd.f32 %v616, 1e-05
  %v621 = vadd.f32 %v617, 1e-05
  %v622 = vadd.f32 %v618, 1e-05
  %v623 = vrsqrt.pop %v619
  %v624 = vrsqrt.pop %v620
  %v625 = vrsqrt.pop %v621
  %v626 = vrsqrt.pop %v622
  %v627 = vmul.f32 %v595, %v623
  %v628 = vmul.f32 %v596, %v624
  %v629 = vmul.f32 %v597, %v625
  %v630 = vmul.f32 %v598, %v626
  %v631 = vld [vmem:[%s3] sm:$0xff]
  %v632 = vld [vmem:[%s3 + $0x8] sm:$0xff]
  %v633 = vld [vmem:[%s3 + $0x10] sm:$0xff]
  %v634 = vld [vmem:[%s3 + $0x18] sm:$0xff]
  %636 = vset.pattern.permute.xlu0 0
  %637 = vperm.xlu0 %636, %v631
  %v638 = vpop.permute.xlu0 %637
  %641 = vset.pattern.permute.xlu0 0
  %642 = vperm.xlu0 %641, %v632
  %v643 = vpop.permute.xlu0 %642
  %646 = vset.pattern.permute.xlu0 0
  %647 = vperm.xlu0 %646, %v633
  %v648 = vpop.permute.xlu0 %647
  %651 = vset.pattern.permute.xlu0 0
  %652 = vperm.xlu0 %651, %v634
  %v653 = vpop.permute.xlu0 %652
  %v655 = vmul.f32 %v627, %v638
  %v656 = vmul.f32 %v628, %v643
  %v657 = vmul.f32 %v629, %v648
  %v658 = vmul.f32 %v630, %v653
  %v659 = vld [vmem:[%s4] sm:$0xff]
  %v660 = vld [vmem:[%s4 + $0x8] sm:$0xff]
  %v661 = vld [vmem:[%s4 + $0x10] sm:$0xff]
  %v662 = vld [vmem:[%s4 + $0x18] sm:$0xff]
  %664 = vset.pattern.permute.xlu0 0
  %665 = vperm.xlu0 %664, %v659
  %v666 = vpop.permute.xlu0 %665
  %669 = vset.pattern.permute.xlu0 0
  %670 = vperm.xlu0 %669, %v660
  %v671 = vpop.permute.xlu0 %670
  %674 = vset.pattern.permute.xlu0 0
  %675 = vperm.xlu0 %674, %v661
  %v676 = vpop.permute.xlu0 %675
  %679 = vset.pattern.permute.xlu0 0
  %680 = vperm.xlu0 %679, %v662
  %v681 = vpop.permute.xlu0 %680
  %v683 = vadd.f32 %v655, %v666
  %v684 = vadd.f32 %v656, %v671
  %v685 = vadd.f32 %v657, %v676
  %v686 = vadd.f32 %v658, %v681
  %v687 = vmax.f32 %v683, 0.0
  %v688 = vmax.f32 %v684, 0.0
  %v689 = vmax.f32 %v685, 0.0
  %v690 = vmax.f32 %v686, 0.0
  %v691 = vpack.c.bf16 %v688, %v687
  %v692 = vpack.c.bf16 %v690, %v689
  %v695 = vunpack.c.l.b16 %v691
  %v696 = vunpack.c.h.b16 %v691
  %v697 = vunpack.c.l.b16 %v692
  %v698 = vunpack.c.h.b16 %v692
  %v699 = vpack.c.b16 %v695, %v695
  %v700 = vpack.c.b16 %v696, %v696
  %v701 = vpack.c.b16 %v697, %v697
  %v702 = vpack.c.b16 %v698, %v698
  %vm707 = vcmask 584704
  %708 = vst.msk [vmem:[%s5] sm:$0xf] %vm707, %v699
  %709 = vst.msk [vmem:[%s5 + $0x4] sm:$0xf] %vm707, %v700
  %710 = vst.msk [vmem:[%s5 + $0x8] sm:$0xf] %vm707, %v701
  %711 = vst.msk [vmem:[%s5 + $0xc] sm:$0xf] %vm707, %v702
  // Predicated region
  $region22: #{forward.4} parent=0 // pred_check
    _
  $region23: #{forward.4} parent=0 // pred_check_branch
    %713 = sbr.rel (0) target = $region25
  $region24: #{forward.4} parent=0 // pred_region
    _
  $region25: #{forward.4} parent=0 // pred_fallthru
    _
  // Predicated region
  $region26: #{forward.4} parent=0 // pred_check
    _
  $region27: #{forward.4} parent=0 // pred_check_branch
    %715 = sbr.rel (0) target = $region29
  $region28: #{forward.4} parent=0 // pred_region
    _
  $region29: #{forward.4} parent=0 // pred_fallthru
    _

// kernel: forward.5
$region0: #{forward.5}
  #allocation0 [shape = 'u32[]', space=smem, size = 0x4, offset = 0x4, fixed_abs, tag = 'smem constant byte address 0x4 - core index']
  #allocation1 [shape = 'u32[144,128]{1,0:T(1,128)}', space=vmem, size = 0x12000, scoped, tag = 'internal scratch']
  %s0 = inlined_call_operand.vmem [shape: bf16[2,1152], index: 0, kind: input, shape index: {}]
  %s1 = inlined_call_operand.vmem [shape: bf16[1152,128], index: 1, kind: input, shape index: {}]
  %s2 = inlined_call_operand.vmem [shape: f32[1,128], index: 2, kind: input, shape index: {}]
  %s3 = inlined_call_operand.vmem [shape: bf16[128,128], index: 3, kind: input, shape index: {}]
  %s4 = inlined_call_operand.vmem [shape: f32[1,128], index: 4, kind: input, shape index: {}]
  %s5 = inlined_call_operand.hbm [shape: f32[2,128], index: 5, kind: output, shape index: {}]
  %s6 = sld [smem:[#allocation0]]
  $region30: #{forward.5} parent=0
    _
  %s8 = ssub.s32 1, %s6
  %s9 = scalar_select 0, %s8, %s6
  $region1: #{forward.5} parent=0
    #allocation2 [shape = 'u8[1024]{0}', space=vmem, size = 0x400, scoped, tag = 'output window, operand 0, single buffered']
    #allocation3 [shape = 's32[1]{0}', space=sflag, size = 0x4, scoped, tag = 'scoped memory for forward.5']
    %10 = vsyncpa [#allocation3], 0
    // Predicated region
    $region2: #{forward.5} parent=1 // pred_check
      _
    $region3: #{forward.5} parent=1 // pred_check_branch
      %12 = sbr.rel (0) target = $region5
    $region4: #{forward.5} parent=1 // pred_region
      _
    $region5: #{forward.5} parent=1 // pred_fallthru
      _
    // Predicated region
    $region6: #{forward.5} parent=1 // pred_check
      _
    $region7: #{forward.5} parent=1 // pred_check_branch
      %14 = sbr.rel (0) target = $region9
    $region8: #{forward.5} parent=1 // pred_region
      _
    $region9: #{forward.5} parent=1 // pred_fallthru
      _
    // Predicated region
    $region10: #{forward.5} parent=1 // pred_check
      _
    $region11: #{forward.5} parent=1 // pred_check_branch
      %16 = sbr.rel (0) target = $region13
    $region12: #{forward.5} parent=1 // pred_region
      _
    $region13: #{forward.5} parent=1 // pred_fallthru
      _
    // Predicated region
    $region14: #{forward.5} parent=1 // pred_check
      _
    $region15: #{forward.5} parent=1 // pred_check_branch
      %18 = sbr.rel (0) target = $region17
    $region16: #{forward.5} parent=1 // pred_region
      _
    $region17: #{forward.5} parent=1 // pred_fallthru
      _
    // Predicated region
    $region18: #{forward.5} parent=1 // pred_check
      _
    $region19: #{forward.5} parent=1 // pred_check_branch
      %20 = sbr.rel (0) target = $region21
    $region20: #{forward.5} parent=1 // pred_region
      _
    $region21: #{forward.5} parent=1 // pred_fallthru
      _
    %v22 = vld [vmem:[%s0] sm:$0xff]
    %v23 = vld [vmem:[%s0 + $0x8] sm:$0x1]
    %v24 = vld [vmem:[%s1] sm:$0xf]
    %v25 = vld [vmem:[%s1 + $0x4] sm:$0xf]
    %v26 = vld [vmem:[%s1 + $0x8] sm:$0xf]
    %v27 = vld [vmem:[%s1 + $0xc] sm:$0xf]
    %v28 = vld [vmem:[%s1 + $0x10] sm:$0xf]
    %v29 = vld [vmem:[%s1 + $0x14] sm:$0xf]
    %v30 = vld [vmem:[%s1 + $0x18] sm:$0xf]
    %v31 = vld [vmem:[%s1 + $0x1c] sm:$0xf]
    %v32 = vld [vmem:[%s1 + $0x20] sm:$0xf]
    %v33 = vld [vmem:[%s1 + $0x24] sm:$0xf]
    %v34 = vld [vmem:[%s1 + $0x28] sm:$0xf]
    %v35 = vld [vmem:[%s1 + $0x2c] sm:$0xf]
    %v36 = vld [vmem:[%s1 + $0x30] sm:$0xf]
    %v37 = vld [vmem:[%s1 + $0x34] sm:$0xf]
    %v38 = vld [vmem:[%s1 + $0x38] sm:$0xf]
    %v39 = vld [vmem:[%s1 + $0x3c] sm:$0xf]
    %v40 = vld [vmem:[%s1 + $0x40] sm:$0xf]
    %v41 = vld [vmem:[%s1 + $0x44] sm:$0xf]
    %v42 = vld [vmem:[%s1 + $0x48] sm:$0xf]
    %v43 = vld [vmem:[%s1 + $0x4c] sm:$0xf]
    %v44 = vld [vmem:[%s1 + $0x50] sm:$0xf]
    %v45 = vld [vmem:[%s1 + $0x54] sm:$0xf]
    %v46 = vld [vmem:[%s1 + $0x58] sm:$0xf]
    %v47 = vld [vmem:[%s1 + $0x5c] sm:$0xf]
    %v48 = vld [vmem:[%s1 + $0x60] sm:$0xf]
    %v49 = vld [vmem:[%s1 + $0x64] sm:$0xf]
    %v50 = vld [vmem:[%s1 + $0x68] sm:$0xf]
    %v51 = vld [vmem:[%s1 + $0x6c] sm:$0xf]
    %v52 = vld [vmem:[%s1 + $0x70] sm:$0xf]
    %v53 = vld [vmem:[%s1 + $0x74] sm:$0xf]
    %v54 = vld [vmem:[%s1 + $0x78] sm:$0xf]
    %v55 = vld [vmem:[%s1 + $0x7c] sm:$0xf]
    %v56 = vld [vmem:[%s1 + $0x80] sm:$0xf]
    %v57 = vld [vmem:[%s1 + $0x84] sm:$0xf]
    %v58 = vld [vmem:[%s1 + $0x88] sm:$0xf]
    %v59 = vld [vmem:[%s1 + $0x8c] sm:$0xf]
    %v60 = vld [vmem:[%s1 + $0x90] sm:$0xf]
    %v61 = vld [vmem:[%s1 + $0x94] sm:$0xf]
    %v62 = vld [vmem:[%s1 + $0x98] sm:$0xf]
    %v63 = vld [vmem:[%s1 + $0x9c] sm:$0xf]
    %v64 = vld [vmem:[%s1 + $0xa0] sm:$0xf]
    %v65 = vld [vmem:[%s1 + $0xa4] sm:$0xf]
    %v66 = vld [vmem:[%s1 + $0xa8] sm:$0xf]
    %v67 = vld [vmem:[%s1 + $0xac] sm:$0xf]
    %v68 = vld [vmem:[%s1 + $0xb0] sm:$0xf]
    %v69 = vld [vmem:[%s1 + $0xb4] sm:$0xf]
    %v70 = vld [vmem:[%s1 + $0xb8] sm:$0xf]
    %v71 = vld [vmem:[%s1 + $0xbc] sm:$0xf]
    %v72 = vld [vmem:[%s1 + $0xc0] sm:$0xf]
    %v73 = vld [vmem:[%s1 + $0xc4] sm:$0xf]
    %v74 = vld [vmem:[%s1 + $0xc8] sm:$0xf]
    %v75 = vld [vmem:[%s1 + $0xcc] sm:$0xf]
    %v76 = vld [vmem:[%s1 + $0xd0] sm:$0xf]
    %v77 = vld [vmem:[%s1 + $0xd4] sm:$0xf]
    %v78 = vld [vmem:[%s1 + $0xd8] sm:$0xf]
    %v79 = vld [vmem:[%s1 + $0xdc] sm:$0xf]
    %v80 = vld [vmem:[%s1 + $0xe0] sm:$0xf]
    %v81 = vld [vmem:[%s1 + $0xe4] sm:$0xf]
    %v82 = vld [vmem:[%s1 + $0xe8] sm:$0xf]
    %v83 = vld [vmem:[%s1 + $0xec] sm:$0xf]
    %v84 = vld [vmem:[%s1 + $0xf0] sm:$0xf]
    %v85 = vld [vmem:[%s1 + $0xf4] sm:$0xf]
    %v86 = vld [vmem:[%s1 + $0xf8] sm:$0xf]
    %v87 = vld [vmem:[%s1 + $0xfc] sm:$0xf]
    %v88 = vld [vmem:[%s1 + $0x100] sm:$0xf]
    %v89 = vld [vmem:[%s1 + $0x104] sm:$0xf]
    %v90 = vld [vmem:[%s1 + $0x108] sm:$0xf]
    %v91 = vld [vmem:[%s1 + $0x10c] sm:$0xf]
    %v92 = vld [vmem:[%s1 + $0x110] sm:$0xf]
    %v93 = vld [vmem:[%s1 + $0x114] sm:$0xf]
    %v94 = vld [vmem:[%s1 + $0x118] sm:$0xf]
    %v95 = vld [vmem:[%s1 + $0x11c] sm:$0xf]
    %v96 = vld [vmem:[%s1 + $0x120] sm:$0xf]
    %v97 = vld [vmem:[%s1 + $0x124] sm:$0xf]
    %v98 = vld [vmem:[%s1 + $0x128] sm:$0xf]
    %v99 = vld [vmem:[%s1 + $0x12c] sm:$0xf]
    %v100 = vld [vmem:[%s1 + $0x130] sm:$0xf]
    %v101 = vld [vmem:[%s1 + $0x134] sm:$0xf]
    %v102 = vld [vmem:[%s1 + $0x138] sm:$0xf]
    %v103 = vld [vmem:[%s1 + $0x13c] sm:$0xf]
    %v104 = vld [vmem:[%s1 + $0x140] sm:$0xf]
    %v105 = vld [vmem:[%s1 + $0x144] sm:$0xf]
    %v106 = vld [vmem:[%s1 + $0x148] sm:$0xf]
    %v107 = vld [vmem:[%s1 + $0x14c] sm:$0xf]
    %v108 = vld [vmem:[%s1 + $0x150] sm:$0xf]
    %v109 = vld [vmem:[%s1 + $0x154] sm:$0xf]
    %v110 = vld [vmem:[%s1 + $0x158] sm:$0xf]
    %v111 = vld [vmem:[%s1 + $0x15c] sm:$0xf]
    %v112 = vld [vmem:[%s1 + $0x160] sm:$0xf]
    %v113 = vld [vmem:[%s1 + $0x164] sm:$0xf]
    %v114 = vld [vmem:[%s1 + $0x168] sm:$0xf]
    %v115 = vld [vmem:[%s1 + $0x16c] sm:$0xf]
    %v116 = vld [vmem:[%s1 + $0x170] sm:$0xf]
    %v117 = vld [vmem:[%s1 + $0x174] sm:$0xf]
    %v118 = vld [vmem:[%s1 + $0x178] sm:$0xf]
    %v119 = vld [vmem:[%s1 + $0x17c] sm:$0xf]
    %v120 = vld [vmem:[%s1 + $0x180] sm:$0xf]
    %v121 = vld [vmem:[%s1 + $0x184] sm:$0xf]
    %v122 = vld [vmem:[%s1 + $0x188] sm:$0xf]
    %v123 = vld [vmem:[%s1 + $0x18c] sm:$0xf]
    %v124 = vld [vmem:[%s1 + $0x190] sm:$0xf]
    %v125 = vld [vmem:[%s1 + $0x194] sm:$0xf]
    %v126 = vld [vmem:[%s1 + $0x198] sm:$0xf]
    %v127 = vld [vmem:[%s1 + $0x19c] sm:$0xf]
    %v128 = vld [vmem:[%s1 + $0x1a0] sm:$0xf]
    %v129 = vld [vmem:[%s1 + $0x1a4] sm:$0xf]
    %v130 = vld [vmem:[%s1 + $0x1a8] sm:$0xf]
    %v131 = vld [vmem:[%s1 + $0x1ac] sm:$0xf]
    %v132 = vld [vmem:[%s1 + $0x1b0] sm:$0xf]
    %v133 = vld [vmem:[%s1 + $0x1b4] sm:$0xf]
    %v134 = vld [vmem:[%s1 + $0x1b8] sm:$0xf]
    %v135 = vld [vmem:[%s1 + $0x1bc] sm:$0xf]
    %v136 = vld [vmem:[%s1 + $0x1c0] sm:$0xf]
    %v137 = vld [vmem:[%s1 + $0x1c4] sm:$0xf]
    %v138 = vld [vmem:[%s1 + $0x1c8] sm:$0xf]
    %v139 = vld [vmem:[%s1 + $0x1cc] sm:$0xf]
    %v140 = vld [vmem:[%s1 + $0x1d0] sm:$0xf]
    %v141 = vld [vmem:[%s1 + $0x1d4] sm:$0xf]
    %v142 = vld [vmem:[%s1 + $0x1d8] sm:$0xf]
    %v143 = vld [vmem:[%s1 + $0x1dc] sm:$0xf]
    %v144 = vld [vmem:[%s1 + $0x1e0] sm:$0xf]
    %v145 = vld [vmem:[%s1 + $0x1e4] sm:$0xf]
    %v146 = vld [vmem:[%s1 + $0x1e8] sm:$0xf]
    %v147 = vld [vmem:[%s1 + $0x1ec] sm:$0xf]
    %v148 = vld [vmem:[%s1 + $0x1f0] sm:$0xf]
    %v149 = vld [vmem:[%s1 + $0x1f4] sm:$0xf]
    %v150 = vld [vmem:[%s1 + $0x1f8] sm:$0xf]
    %v151 = vld [vmem:[%s1 + $0x1fc] sm:$0xf]
    %v152 = vld [vmem:[%s1 + $0x200] sm:$0xf]
    %v153 = vld [vmem:[%s1 + $0x204] sm:$0xf]
    %v154 = vld [vmem:[%s1 + $0x208] sm:$0xf]
    %v155 = vld [vmem:[%s1 + $0x20c] sm:$0xf]
    %v156 = vld [vmem:[%s1 + $0x210] sm:$0xf]
    %v157 = vld [vmem:[%s1 + $0x214] sm:$0xf]
    %v158 = vld [vmem:[%s1 + $0x218] sm:$0xf]
    %v159 = vld [vmem:[%s1 + $0x21c] sm:$0xf]
    %v160 = vld [vmem:[%s1 + $0x220] sm:$0xf]
    %v161 = vld [vmem:[%s1 + $0x224] sm:$0xf]
    %v162 = vld [vmem:[%s1 + $0x228] sm:$0xf]
    %v163 = vld [vmem:[%s1 + $0x22c] sm:$0xf]
    %v164 = vld [vmem:[%s1 + $0x230] sm:$0xf]
    %v165 = vld [vmem:[%s1 + $0x234] sm:$0xf]
    %v166 = vld [vmem:[%s1 + $0x238] sm:$0xf]
    %v167 = vld [vmem:[%s1 + $0x23c] sm:$0xf]
    %v168 = vld [vmem:[%s2] sm:$0x1]
    %v170 = vlaneseq
    %v171 = vshrl.u32 %v170, 7
    %v172 = vsub.s32 0, %v171
    %v173 = vrot.slane %v168, %v172
    %v177 = vcombine.high %v22, %v22
    %v179 = vunpack.c.l.s4 1966171168
    %v180 = vunpack.c.0.s8 %v179
    %v181 = vlaneseq
    %v182 = vshrl.u32 %v181, 7
    %v183 = vsub.s32 %v180, %v182
    %v184 = vrot.slane %v22, %v183
    %v186 = vunpack.c.l.s4 1966171168
    %v187 = vunpack.c.0.s8 %v186
    %v188 = vlaneseq
    %v189 = vshrl.u32 %v188, 7
    %v190 = vsub.s32 %v187, %v189
    %v191 = vrot.slane %v177, %v190
    %v192 = vcombine.high %v184, %v184
    %v193 = vcombine.high %v191, %v191
    %v195 = vunpack.c.l.s4 1966171168
    %v196 = vunpack.c.0.s8 %v195
    %v197 = vlaneseq
    %v198 = vshrl.u32 %v197, 7
    %v199 = vsub.s32 %v196, %v198
    %v200 = vrot.slane %v184, %v199
    %v202 = vunpack.c.l.s4 1966171168
    %v203 = vunpack.c.0.s8 %v202
    %v204 = vlaneseq
    %v205 = vshrl.u32 %v204, 7
    %v206 = vsub.s32 %v203, %v205
    %v207 = vrot.slane %v191, %v206
    %v209 = vunpack.c.l.s4 1966171168
    %v210 = vunpack.c.0.s8 %v209
    %v211 = vlaneseq
    %v212 = vshrl.u32 %v211, 7
    %v213 = vsub.s32 %v210, %v212
    %v214 = vrot.slane %v192, %v213
    %v216 = vunpack.c.l.s4 1966171168
    %v217 = vunpack.c.0.s8 %v216
    %v218 = vlaneseq
    %v219 = vshrl.u32 %v218, 7
    %v220 = vsub.s32 %v217, %v219
    %v221 = vrot.slane %v193, %v220
    %v222 = vcombine.high %v200, %v200
    %v223 = vcombine.high %v207, %v207
    %v224 = vcombine.high %v214, %v214
    %v225 = vcombine.high %v221, %v221
    %v227 = vunpack.c.l.s4 1966171168
    %v228 = vunpack.c.0.s8 %v227
    %v229 = vlaneseq
    %v230 = vshrl.u32 %v229, 7
    %v231 = vsub.s32 %v228, %v230
    %v232 = vrot.slane %v23, %v231
    %v234 = vunpack.c.l.s4 1966171168
    %v235 = vunpack.c.0.s8 %v234
    %v236 = vlaneseq
    %v237 = vshrl.u32 %v236, 7
    %v238 = vsub.s32 %v235, %v237
    %v239 = vrot.slane %v232, %v238
    %v393 = vunpack.c.l.b16 %v24
    %v394 = vunpack.c.l.b16 %v25
    %v395 = vunpack.c.l.b16 %v26
    %v396 = vunpack.c.l.b16 %v27
    %v397 = vunpack.c.l.b16 %v28
    %v398 = vunpack.c.l.b16 %v29
    %v399 = vunpack.c.l.b16 %v30
    %v400 = vunpack.c.l.b16 %v31
    %v401 = vunpack.c.l.b16 %v32
    %v402 = vunpack.c.l.b16 %v33
    %v403 = vunpack.c.l.b16 %v34
    %v404 = vunpack.c.l.b16 %v35
    %v405 = vunpack.c.l.b16 %v36
    %v406 = vunpack.c.l.b16 %v37
    %v407 = vunpack.c.l.b16 %v38
    %v408 = vunpack.c.l.b16 %v39
    %v409 = vunpack.c.l.b16 %v40
    %v410 = vunpack.c.l.b16 %v41
    %v411 = vunpack.c.l.b16 %v42
    %v412 = vunpack.c.l.b16 %v43
    %v413 = vunpack.c.l.b16 %v44
    %v414 = vunpack.c.l.b16 %v45
    %v415 = vunpack.c.l.b16 %v46
    %v416 = vunpack.c.l.b16 %v47
    %v417 = vunpack.c.l.b16 %v48
    %v418 = vunpack.c.l.b16 %v49
    %v419 = vunpack.c.l.b16 %v50
    %v420 = vunpack.c.l.b16 %v51
    %v421 = vunpack.c.l.b16 %v52
    %v422 = vunpack.c.l.b16 %v53
    %v423 = vunpack.c.l.b16 %v54
    %v424 = vunpack.c.l.b16 %v55
    %v425 = vunpack.c.l.b16 %v56
    %v426 = vunpack.c.l.b16 %v57
    %v427 = vunpack.c.l.b16 %v58
    %v428 = vunpack.c.l.b16 %v59
    %v429 = vunpack.c.l.b16 %v60
    %v430 = vunpack.c.l.b16 %v61
    %v431 = vunpack.c.l.b16 %v62
    %v432 = vunpack.c.l.b16 %v63
    %v433 = vunpack.c.l.b16 %v64
    %v434 = vunpack.c.l.b16 %v65
    %v435 = vunpack.c.l.b16 %v66
    %v436 = vunpack.c.l.b16 %v67
    %v437 = vunpack.c.l.b16 %v68
    %v438 = vunpack.c.l.b16 %v69
    %v439 = vunpack.c.l.b16 %v70
    %v440 = vunpack.c.l.b16 %v71
    %v441 = vunpack.c.l.b16 %v72
    %v442 = vunpack.c.l.b16 %v73
    %v443 = vunpack.c.l.b16 %v74
    %v444 = vunpack.c.l.b16 %v75
    %v445 = vunpack.c.l.b16 %v76
    %v446 = vunpack.c.l.b16 %v77
    %v447 = vunpack.c.l.b16 %v78
    %v448 = vunpack.c.l.b16 %v79
    %v449 = vunpack.c.l.b16 %v80
    %v450 = vunpack.c.l.b16 %v81
    %v451 = vunpack.c.l.b16 %v82
    %v452 = vunpack.c.l.b16 %v83
    %v453 = vunpack.c.l.b16 %v84
    %v454 = vunpack.c.l.b16 %v85
    %v455 = vunpack.c.l.b16 %v86
    %v456 = vunpack.c.l.b16 %v87
    %v457 = vunpack.c.l.b16 %v88
    %v458 = vunpack.c.l.b16 %v89
    %v459 = vunpack.c.l.b16 %v90
    %v460 = vunpack.c.l.b16 %v91
    %v461 = vunpack.c.l.b16 %v92
    %v462 = vunpack.c.l.b16 %v93
    %v463 = vunpack.c.l.b16 %v94
    %v464 = vunpack.c.l.b16 %v95
    %v465 = vunpack.c.l.b16 %v96
    %v466 = vunpack.c.l.b16 %v97
    %v467 = vunpack.c.l.b16 %v98
    %v468 = vunpack.c.l.b16 %v99
    %v469 = vunpack.c.l.b16 %v100
    %v470 = vunpack.c.l.b16 %v101
    %v471 = vunpack.c.l.b16 %v102
    %v472 = vunpack.c.l.b16 %v103
    %v473 = vunpack.c.l.b16 %v104
    %v474 = vunpack.c.l.b16 %v105
    %v475 = vunpack.c.l.b16 %v106
    %v476 = vunpack.c.l.b16 %v107
    %v477 = vunpack.c.l.b16 %v108
    %v478 = vunpack.c.l.b16 %v109
    %v479 = vunpack.c.l.b16 %v110
    %v480 = vunpack.c.l.b16 %v111
    %v481 = vunpack.c.l.b16 %v112
    %v482 = vunpack.c.l.b16 %v113
    %v483 = vunpack.c.l.b16 %v114
    %v484 = vunpack.c.l.b16 %v115
    %v485 = vunpack.c.l.b16 %v116
    %v486 = vunpack.c.l.b16 %v117
    %v487 = vunpack.c.l.b16 %v118
    %v488 = vunpack.c.l.b16 %v119
    %v489 = vunpack.c.l.b16 %v120
    %v490 = vunpack.c.l.b16 %v121
    %v491 = vunpack.c.l.b16 %v122
    %v492 = vunpack.c.l.b16 %v123
    %v493 = vunpack.c.l.b16 %v124
    %v494 = vunpack.c.l.b16 %v125
    %v495 = vunpack.c.l.b16 %v126
    %v496 = vunpack.c.l.b16 %v127
    %v497 = vunpack.c.l.b16 %v128
    %v498 = vunpack.c.l.b16 %v129
    %v499 = vunpack.c.l.b16 %v130
    %v500 = vunpack.c.l.b16 %v131
    %v501 = vunpack.c.l.b16 %v132
    %v502 = vunpack.c.l.b16 %v133
    %v503 = vunpack.c.l.b16 %v134
    %v504 = vunpack.c.l.b16 %v135
    %v505 = vunpack.c.l.b16 %v136
    %v506 = vunpack.c.l.b16 %v137
    %v507 = vunpack.c.l.b16 %v138
    %v508 = vunpack.c.l.b16 %v139
    %v509 = vunpack.c.l.b16 %v140
    %v510 = vunpack.c.l.b16 %v141
    %v511 = vunpack.c.l.b16 %v142
    %v512 = vunpack.c.l.b16 %v143
    %v513 = vunpack.c.l.b16 %v144
    %v514 = vunpack.c.l.b16 %v145
    %v515 = vunpack.c.l.b16 %v146
    %v516 = vunpack.c.l.b16 %v147
    %v517 = vunpack.c.l.b16 %v148
    %v518 = vunpack.c.l.b16 %v149
    %v519 = vunpack.c.l.b16 %v150
    %v520 = vunpack.c.l.b16 %v151
    %v521 = vunpack.c.l.b16 %v152
    %v522 = vunpack.c.l.b16 %v153
    %v523 = vunpack.c.l.b16 %v154
    %v524 = vunpack.c.l.b16 %v155
    %v525 = vunpack.c.l.b16 %v156
    %v526 = vunpack.c.l.b16 %v157
    %v527 = vunpack.c.l.b16 %v158
    %v528 = vunpack.c.l.b16 %v159
    %v529 = vunpack.c.l.b16 %v160
    %v530 = vunpack.c.l.b16 %v161
    %v531 = vunpack.c.l.b16 %v162
    %v532 = vunpack.c.l.b16 %v163
    %v533 = vunpack.c.l.b16 %v164
    %v534 = vunpack.c.l.b16 %v165
    %v535 = vunpack.c.l.b16 %v166
    %v536 = vunpack.c.l.b16 %v167
    %v537 = vpack.c.b16 %v394, %v393
    %v538 = vpack.c.b16 %v396, %v395
    %v539 = vpack.c.b16 %v398, %v397
    %v540 = vpack.c.b16 %v400, %v399
    %v541 = vpack.c.b16 %v402, %v401
    %v542 = vpack.c.b16 %v404, %v403
    %v543 = vpack.c.b16 %v406, %v405
    %v544 = vpack.c.b16 %v408, %v407
    %v545 = vpack.c.b16 %v410, %v409
    %v546 = vpack.c.b16 %v412, %v411
    %v547 = vpack.c.b16 %v414, %v413
    %v548 = vpack.c.b16 %v416, %v415
    %v549 = vpack.c.b16 %v418, %v417
    %v550 = vpack.c.b16 %v420, %v419
    %v551 = vpack.c.b16 %v422, %v421
    %v552 = vpack.c.b16 %v424, %v423
    %v553 = vpack.c.b16 %v426, %v425
    %v554 = vpack.c.b16 %v428, %v427
    %v555 = vpack.c.b16 %v430, %v429
    %v556 = vpack.c.b16 %v432, %v431
    %v557 = vpack.c.b16 %v434, %v433
    %v558 = vpack.c.b16 %v436, %v435
    %v559 = vpack.c.b16 %v438, %v437
    %v560 = vpack.c.b16 %v440, %v439
    %v561 = vpack.c.b16 %v442, %v441
    %v562 = vpack.c.b16 %v444, %v443
    %v563 = vpack.c.b16 %v446, %v445
    %v564 = vpack.c.b16 %v448, %v447
    %v565 = vpack.c.b16 %v450, %v449
    %v566 = vpack.c.b16 %v452, %v451
    %v567 = vpack.c.b16 %v454, %v453
    %v568 = vpack.c.b16 %v456, %v455
    %v569 = vpack.c.b16 %v458, %v457
    %v570 = vpack.c.b16 %v460, %v459
    %v571 = vpack.c.b16 %v462, %v461
    %v572 = vpack.c.b16 %v464, %v463
    %v573 = vpack.c.b16 %v466, %v465
    %v574 = vpack.c.b16 %v468, %v467
    %v575 = vpack.c.b16 %v470, %v469
    %v576 = vpack.c.b16 %v472, %v471
    %v577 = vpack.c.b16 %v474, %v473
    %v578 = vpack.c.b16 %v476, %v475
    %v579 = vpack.c.b16 %v478, %v477
    %v580 = vpack.c.b16 %v480, %v479
    %v581 = vpack.c.b16 %v482, %v481
    %v582 = vpack.c.b16 %v484, %v483
    %v583 = vpack.c.b16 %v486, %v485
    %v584 = vpack.c.b16 %v488, %v487
    %v585 = vpack.c.b16 %v490, %v489
    %v586 = vpack.c.b16 %v492, %v491
    %v587 = vpack.c.b16 %v494, %v493
    %v588 = vpack.c.b16 %v496, %v495
    %v589 = vpack.c.b16 %v498, %v497
    %v590 = vpack.c.b16 %v500, %v499
    %v591 = vpack.c.b16 %v502, %v501
    %v592 = vpack.c.b16 %v504, %v503
    %v593 = vpack.c.b16 %v506, %v505
    %v594 = vpack.c.b16 %v508, %v507
    %v595 = vpack.c.b16 %v510, %v509
    %v596 = vpack.c.b16 %v512, %v511
    %v597 = vpack.c.b16 %v514, %v513
    %v598 = vpack.c.b16 %v516, %v515
    %v599 = vpack.c.b16 %v518, %v517
    %v600 = vpack.c.b16 %v520, %v519
    %v601 = vpack.c.b16 %v522, %v521
    %v602 = vpack.c.b16 %v524, %v523
    %v603 = vpack.c.b16 %v526, %v525
    %v604 = vpack.c.b16 %v528, %v527
    %v605 = vpack.c.b16 %v530, %v529
    %v606 = vpack.c.b16 %v532, %v531
    %v607 = vpack.c.b16 %v534, %v533
    %v608 = vpack.c.b16 %v536, %v535
    %681 = vmatprep.subr.bf16.mxu0 0
    %682 = vmatpush1.bf16.msra.mxu0 %v537
    %683 = vmatprep.subr.bf16.mxu0 0
    %684 = vmatpush1.bf16.msra.mxu0 %v538
    %685 = vmatprep.subr.bf16.mxu0 0
    %686 = vmatpush1.bf16.msra.mxu0 %v539
    %687 = vmatprep.subr.bf16.mxu0 0
    %688 = vmatpush1.bf16.msra.mxu0 %v540
    %689 = vmatprep.subr.bf16.mxu0 0
    %690 = vmatpush1.bf16.msra.mxu0 %v541
    %691 = vmatprep.subr.bf16.mxu0 0
    %692 = vmatpush1.bf16.msra.mxu0 %v542
    %693 = vmatprep.subr.bf16.mxu0 0
    %694 = vmatpush1.bf16.msra.mxu0 %v543
    %695 = vmatprep.subr.bf16.mxu0 0
    %696 = vmatpush1.bf16.msra.mxu0 %v544
    %697 = vmatprep.subr.bf16.mxu0 0
    %698 = vmatpush1.bf16.msra.mxu0 %v545
    %699 = vmatprep.subr.bf16.mxu0 0
    %700 = vmatpush1.bf16.msra.mxu0 %v546
    %701 = vmatprep.subr.bf16.mxu0 0
    %702 = vmatpush1.bf16.msra.mxu0 %v547
    %703 = vmatprep.subr.bf16.mxu0 0
    %704 = vmatpush1.bf16.msra.mxu0 %v548
    %705 = vmatprep.subr.bf16.mxu0 0
    %706 = vmatpush1.bf16.msra.mxu0 %v549
    %707 = vmatprep.subr.bf16.mxu0 0
    %708 = vmatpush1.bf16.msra.mxu0 %v550
    %709 = vmatprep.subr.bf16.mxu0 0
    %710 = vmatpush1.bf16.msra.mxu0 %v551
    %711 = vmatprep.subr.bf16.mxu0 0
    %712 = vmatpush1.bf16.msra.mxu0 %v552
    %713 = vmatprep.mubr.bf16.mxu0 %v214
    %714 = vmatmul.mubr.bf16.gmra.mrb[0].mxu0 %v200
    %v715 = vpop.f32.mrb[0].mxu0
    %v716 = vadd.f32 %v173, %v715
    %v717 = vpop.f32.mrb[0].mxu0
    %v718 = vpop.f32.mrb[0].mxu0
    %v719 = vpop.f32.mrb[0].mxu0
    %720 = vdwg.mxu0
    %721 = vmatprep.subr.bf16.mxu0 0
    %722 = vmatpush1.bf16.msra.mxu0 %v553
    %723 = vmatprep.subr.bf16.mxu0 0
    %724 = vmatpush1.bf16.msra.mxu0 %v554
    %725 = vmatprep.subr.bf16.mxu0 0
    %726 = vmatpush1.bf16.msra.mxu0 %v555
    %727 = vmatprep.subr.bf16.mxu0 0
    %728 = vmatpush1.bf16.msra.mxu0 %v556
    %729 = vmatprep.subr.bf16.mxu0 0
    %730 = vmatpush1.bf16.msra.mxu0 %v557
    %731 = vmatprep.subr.bf16.mxu0 0
    %732 = vmatpush1.bf16.msra.mxu0 %v558
    %733 = vmatprep.subr.bf16.mxu0 0
    %734 = vmatpush1.bf16.msra.mxu0 %v559
    %735 = vmatprep.subr.bf16.mxu0 0
    %736 = vmatpush1.bf16.msra.mxu0 %v560
    %737 = vmatprep.subr.bf16.mxu0 0
    %738 = vmatpush1.bf16.msra.mxu0 %v561
    %739 = vmatprep.subr.bf16.mxu0 0
    %740 = vmatpush1.bf16.msra.mxu0 %v562
    %741 = vmatprep.subr.bf16.mxu0 0
    %742 = vmatpush1.bf16.msra.mxu0 %v563
    %743 = vmatprep.subr.bf16.mxu0 0
    %744 = vmatpush1.bf16.msra.mxu0 %v564
    %745 = vmatprep.subr.bf16.mxu0 0
    %746 = vmatpush1.bf16.msra.mxu0 %v565
    %747 = vmatprep.subr.bf16.mxu0 0
    %748 = vmatpush1.bf16.msra.mxu0 %v566
    %749 = vmatprep.subr.bf16.mxu0 0
    %750 = vmatpush1.bf16.msra.mxu0 %v567
    %751 = vmatprep.subr.bf16.mxu0 0
    %752 = vmatpush1.bf16.msra.mxu0 %v568
    %753 = vmatprep.mubr.bf16.mxu0 %v224
    %754 = vmatmul.mubr.bf16.gmra.mrb[0].mxu0 %v222
    %v755 = vpop.f32.mrb[0].mxu0
    %v756 = vadd.f32 %v716, %v755
    %v757 = vpop.f32.mrb[0].mxu0
    %v758 = vpop.f32.mrb[0].mxu0
    %v759 = vpop.f32.mrb[0].mxu0
    %760 = vdwg.mxu0
    %761 = vmatprep.subr.bf16.mxu0 0
    %762 = vmatpush1.bf16.msra.mxu0 %v569
    %763 = vmatprep.subr.bf16.mxu0 0
    %764 = vmatpush1.bf16.msra.mxu0 %v570
    %765 = vmatprep.subr.bf16.mxu0 0
    %766 = vmatpush1.bf16.msra.mxu0 %v571
    %767 = vmatprep.subr.bf16.mxu0 0
    %768 = vmatpush1.bf16.msra.mxu0 %v572
    %769 = vmatprep.subr.bf16.mxu0 0
    %770 = vmatpush1.bf16.msra.mxu0 %v573
    %771 = vmatprep.subr.bf16.mxu0 0
    %772 = vmatpush1.bf16.msra.mxu0 %v574
    %773 = vmatprep.subr.bf16.mxu0 0
    %774 = vmatpush1.bf16.msra.mxu0 %v575
    %775 = vmatprep.subr.bf16.mxu0 0
    %776 = vmatpush1.bf16.msra.mxu0 %v576
    %777 = vmatprep.subr.bf16.mxu0 0
    %778 = vmatpush1.bf16.msra.mxu0 %v577
    %779 = vmatprep.subr.bf16.mxu0 0
    %780 = vmatpush1.bf16.msra.mxu0 %v578
    %781 = vmatprep.subr.bf16.mxu0 0
    %782 = vmatpush1.bf16.msra.mxu0 %v579
    %783 = vmatprep.subr.bf16.mxu0 0
    %784 = vmatpush1.bf16.msra.mxu0 %v580
    %785 = vmatprep.subr.bf16.mxu0 0
    %786 = vmatpush1.bf16.msra.mxu0 %v581
    %787 = vmatprep.subr.bf16.mxu0 0
    %788 = vmatpush1.bf16.msra.mxu0 %v582
    %789 = vmatprep.subr.bf16.mxu0 0
    %790 = vmatpush1.bf16.msra.mxu0 %v583
    %791 = vmatprep.subr.bf16.mxu0 0
    %792 = vmatpush1.bf16.msra.mxu0 %v584
    %793 = vmatprep.mubr.bf16.mxu0 %v221
    %794 = vmatmul.mubr.bf16.gmra.mrb[0].mxu0 %v207
    %v795 = vpop.f32.mrb[0].mxu0
    %v796 = vadd.f32 %v756, %v795
    %v797 = vpop.f32.mrb[0].mxu0
    %v798 = vpop.f32.mrb[0].mxu0
    %v799 = vpop.f32.mrb[0].mxu0
    %800 = vdwg.mxu0
    %801 = vmatprep.subr.bf16.mxu0 0
    %802 = vmatpush1.bf16.msra.mxu0 %v585
    %803 = vmatprep.subr.bf16.mxu0 0
    %804 = vmatpush1.bf16.msra.mxu0 %v586
    %805 = vmatprep.subr.bf16.mxu0 0
    %806 = vmatpush1.bf16.msra.mxu0 %v587
    %807 = vmatprep.subr.bf16.mxu0 0
    %808 = vmatpush1.bf16.msra.mxu0 %v588
    %809 = vmatprep.subr.bf16.mxu0 0
    %810 = vmatpush1.bf16.msra.mxu0 %v589
    %811 = vmatprep.subr.bf16.mxu0 0
    %812 = vmatpush1.bf16.msra.mxu0 %v590
    %813 = vmatprep.subr.bf16.mxu0 0
    %814 = vmatpush1.bf16.msra.mxu0 %v591
    %815 = vmatprep.subr.bf16.mxu0 0
    %816 = vmatpush1.bf16.msra.mxu0 %v592
    %817 = vmatprep.subr.bf16.mxu0 0
    %818 = vmatpush1.bf16.msra.mxu0 %v593
    %819 = vmatprep.subr.bf16.mxu0 0
    %820 = vmatpush1.bf16.msra.mxu0 %v594
    %821 = vmatprep.subr.bf16.mxu0 0
    %822 = vmatpush1.bf16.msra.mxu0 %v595
    %823 = vmatprep.subr.bf16.mxu0 0
    %824 = vmatpush1.bf16.msra.mxu0 %v596
    %825 = vmatprep.subr.bf16.mxu0 0
    %826 = vmatpush1.bf16.msra.mxu0 %v597
    %827 = vmatprep.subr.bf16.mxu0 0
    %828 = vmatpush1.bf16.msra.mxu0 %v598
    %829 = vmatprep.subr.bf16.mxu0 0
    %830 = vmatpush1.bf16.msra.mxu0 %v599
    %831 = vmatprep.subr.bf16.mxu0 0
    %832 = vmatpush1.bf16.msra.mxu0 %v600
    %833 = vmatprep.mubr.bf16.mxu0 %v225
    %834 = vmatmul.mubr.bf16.gmra.mrb[0].mxu0 %v223
    %v835 = vpop.f32.mrb[0].mxu0
    %v836 = vadd.f32 %v796, %v835
    %v837 = vpop.f32.mrb[0].mxu0
    %v838 = vpop.f32.mrb[0].mxu0
    %v839 = vpop.f32.mrb[0].mxu0
    %840 = vdwg.mxu0
    %841 = vmatprep.subr.bf16.mxu0 0
    %842 = vmatpush1.bf16.msra.mxu0 %v601
    %843 = vmatprep.subr.bf16.mxu0 0
    %844 = vmatpush1.bf16.msra.mxu0 %v602
    %845 = vmatprep.subr.bf16.mxu0 0
    %846 = vmatpush1.bf16.msra.mxu0 %v603
    %847 = vmatprep.subr.bf16.mxu0 0
    %848 = vmatpush1.bf16.msra.mxu0 %v604
    %849 = vmatprep.subr.bf16.mxu0 0
    %850 = vmatpush1.bf16.msra.mxu0 %v605
    %851 = vmatprep.subr.bf16.mxu0 0
    %852 = vmatpush1.bf16.msra.mxu0 %v606
    %853 = vmatprep.subr.bf16.mxu0 0
    %854 = vmatpush1.bf16.msra.mxu0 %v607
    %855 = vmatprep.subr.bf16.mxu0 0
    %856 = vmatpush1.bf16.msra.mxu0 %v608
    %857 = vmatprep.subr.bf16.mxu0 0
    %858 = vmatpush1.bf16.msra.mxu0 0
    %859 = vmatprep.subr.bf16.mxu0 0
    %860 = vmatpush1.bf16.msra.mxu0 0
    %861 = vmatprep.subr.bf16.mxu0 0
    %862 = vmatpush1.bf16.msra.mxu0 0
    %863 = vmatprep.subr.bf16.mxu0 0
    %864 = vmatpush1.bf16.msra.mxu0 0
    %865 = vmatprep.subr.bf16.mxu0 0
    %866 = vmatpush1.bf16.msra.mxu0 0
    %867 = vmatprep.subr.bf16.mxu0 0
    %868 = vmatpush1.bf16.msra.mxu0 0
    %869 = vmatprep.subr.bf16.mxu0 0
    %870 = vmatpush1.bf16.msra.mxu0 0
    %871 = vmatprep.subr.bf16.mxu0 0
    %872 = vmatpush1.bf16.msra.mxu0 0
    %873 = vmatprep.mubr.bf16.mxu0 0
    %874 = vmatmul.mubr.bf16.gmra.mrb[0].mxu0 %v239
    %v875 = vpop.f32.mrb[0].mxu0
    %v876 = vadd.f32 %v836, %v875
    %v877 = vpop.f32.mrb[0].mxu0
    %v878 = vpop.f32.mrb[0].mxu0
    %v879 = vpop.f32.mrb[0].mxu0
    %880 = vdwg.mxu0
    %v881 = vmax.f32 %v876, 0.0
    %v882 = vpack.c.bf16 %v881, %v881
    %v883 = vld [vmem:[%s3] sm:$0xf]
    %v884 = vld [vmem:[%s3 + $0x4] sm:$0xf]
    %v885 = vld [vmem:[%s3 + $0x8] sm:$0xf]
    %v886 = vld [vmem:[%s3 + $0xc] sm:$0xf]
    %v887 = vld [vmem:[%s3 + $0x10] sm:$0xf]
    %v888 = vld [vmem:[%s3 + $0x14] sm:$0xf]
    %v889 = vld [vmem:[%s3 + $0x18] sm:$0xf]
    %v890 = vld [vmem:[%s3 + $0x1c] sm:$0xf]
    %v891 = vld [vmem:[%s3 + $0x20] sm:$0xf]
    %v892 = vld [vmem:[%s3 + $0x24] sm:$0xf]
    %v893 = vld [vmem:[%s3 + $0x28] sm:$0xf]
    %v894 = vld [vmem:[%s3 + $0x2c] sm:$0xf]
    %v895 = vld [vmem:[%s3 + $0x30] sm:$0xf]
    %v896 = vld [vmem:[%s3 + $0x34] sm:$0xf]
    %v897 = vld [vmem:[%s3 + $0x38] sm:$0xf]
    %v898 = vld [vmem:[%s3 + $0x3c] sm:$0xf]
    %v899 = vld [vmem:[%s4] sm:$0x1]
    %v901 = vlaneseq
    %v902 = vshrl.u32 %v901, 7
    %v903 = vsub.s32 0, %v902
    %v904 = vrot.slane %v899, %v903
    %v922 = vunpack.c.l.b16 %v883
    %v923 = vunpack.c.l.b16 %v884
    %v924 = vunpack.c.l.b16 %v885
    %v925 = vunpack.c.l.b16 %v886
    %v926 = vunpack.c.l.b16 %v887
    %v927 = vunpack.c.l.b16 %v888
    %v928 = vunpack.c.l.b16 %v889
    %v929 = vunpack.c.l.b16 %v890
    %v930 = vunpack.c.l.b16 %v891
    %v931 = vunpack.c.l.b16 %v892
    %v932 = vunpack.c.l.b16 %v893
    %v933 = vunpack.c.l.b16 %v894
    %v934 = vunpack.c.l.b16 %v895
    %v935 = vunpack.c.l.b16 %v896
    %v936 = vunpack.c.l.b16 %v897
    %v937 = vunpack.c.l.b16 %v898
    %v938 = vpack.c.b16 %v923, %v922
    %v939 = vpack.c.b16 %v925, %v924
    %v940 = vpack.c.b16 %v927, %v926
    %v941 = vpack.c.b16 %v929, %v928
    %v942 = vpack.c.b16 %v931, %v930
    %v943 = vpack.c.b16 %v933, %v932
    %v944 = vpack.c.b16 %v935, %v934
    %v945 = vpack.c.b16 %v937, %v936
    %954 = vmatprep.subr.bf16.mxu0 0
    %955 = vmatpush1.bf16.msra.mxu0 %v938
    %956 = vmatprep.subr.bf16.mxu0 0
    %957 = vmatpush1.bf16.msra.mxu0 %v939
    %958 = vmatprep.subr.bf16.mxu0 0
    %959 = vmatpush1.bf16.msra.mxu0 %v940
    %960 = vmatprep.subr.bf16.mxu0 0
    %961 = vmatpush1.bf16.msra.mxu0 %v941
    %962 = vmatprep.subr.bf16.mxu0 0
    %963 = vmatpush1.bf16.msra.mxu0 %v942
    %964 = vmatprep.subr.bf16.mxu0 0
    %965 = vmatpush1.bf16.msra.mxu0 %v943
    %966 = vmatprep.subr.bf16.mxu0 0
    %967 = vmatpush1.bf16.msra.mxu0 %v944
    %968 = vmatprep.subr.bf16.mxu0 0
    %969 = vmatpush1.bf16.msra.mxu0 %v945
    %970 = vmatprep.subr.bf16.mxu0 0
    %971 = vmatpush1.bf16.msra.mxu0 0
    %972 = vmatprep.subr.bf16.mxu0 0
    %973 = vmatpush1.bf16.msra.mxu0 0
    %974 = vmatprep.subr.bf16.mxu0 0
    %975 = vmatpush1.bf16.msra.mxu0 0
    %976 = vmatprep.subr.bf16.mxu0 0
    %977 = vmatpush1.bf16.msra.mxu0 0
    %978 = vmatprep.subr.bf16.mxu0 0
    %979 = vmatpush1.bf16.msra.mxu0 0
    %980 = vmatprep.subr.bf16.mxu0 0
    %981 = vmatpush1.bf16.msra.mxu0 0
    %982 = vmatprep.subr.bf16.mxu0 0
    %983 = vmatpush1.bf16.msra.mxu0 0
    %984 = vmatprep.subr.bf16.mxu0 0
    %985 = vmatpush1.bf16.msra.mxu0 0
    %986 = vmatprep.mubr.bf16.mxu0 0
    %987 = vmatmul.mubr.bf16.gmra.mrb[0].mxu0 %v882
    %v988 = vpop.f32.mrb[0].mxu0
    %v989 = vadd.f32 %v904, %v988
    %v990 = vpop.f32.mrb[0].mxu0
    %v991 = vpop.f32.mrb[0].mxu0
    %v992 = vpop.f32.mrb[0].mxu0
    %993 = vdwg.mxu0
    %vm994 = vcmask 1041408
    %v995 = vsel %vm994, %v989, -inf
    %996 = vmax.xlane.f32.xlu0 %v995
    %v997 = vpop.xlane.xlu0 %996
    %v998 = vsub.f32 %v989, %v997
    %v999 = vmul.f32 %v998, 1.442695
    %v1000 = vpow.pop %v999
    %v1001 = vsel %vm994, %v1000, 0.0
    %1002 = vadd.xlane.f32.xlu0 %v1001
    %v1003 = vpop.xlane.xlu0 %1002
    %v1004 = vlog2.pop %v1003
    %v1005 = vmul.f32 %v1004, 0.6931472
    %v1006 = vsub.f32 %v998, %v1005
    %1007 = vst [vmem:[#allocation2] sm:$0x3] %v1006
    // Predicated region
    $region22: #{forward.5} parent=1 // pred_check
      _
    $region23: #{forward.5} parent=1 // pred_check_branch
      %1009 = sbr.rel (0) target = $region25
    $region24: #{forward.5} parent=1 // pred_region
      %s1011 = ssub.s32 32, 32
      %1012 = vsyncadd [#allocation3], %s1011
      %s1014 = sshll.u32 [#allocation2], 4
      %s1015 = int_to_ptr.vmem [resolvable:$true] %s1014
      %1017 = dma.vmem_to_hbm [thread:$0]  %s1015, 32, %s5, [#allocation3]
    $region25: #{forward.5} parent=1 // pred_fallthru
      _
    // Predicated region
    $region26: #{forward.5} parent=1 // pred_check
      _
    $region27: #{forward.5} parent=1 // pred_check_branch
      %1019 = sbr.rel (0) target = $region29
    $region28: #{forward.5} parent=1 // pred_region
      %1020 = dma.done [#allocation3], 32
    $region29: #{forward.5} parent=1 // pred_fallthru
      _
    %1021 = vsyncpa [#allocation3], 1

</llo_original>
